<compile_context>
chip_gen: v7x
topology: tpu7x:2x2x1
jax: 0.10.0
libtpu: 0.0.40
codegen_flags: <defaults>
</compile_context>

<pallas_src>
import jax
import jax.numpy as jnp
from jax.experimental import pallas as pl
from jax.experimental.pallas import tpu as pltpu


_LANE = 128
_SUBLANE = 8
# Conservative double-buffered tile budget: fits v5e/v6e (128 MiB physical)
# and v7x (64 MiB physical, 32 MiB default scoped) with headroom.
_VMEM_TILE_BUDGET = 20 * 1024 * 1024
_VMEM_LIMIT_BYTES = 32 * 1024 * 1024


def _round_up(v, m):
    return (v + m - 1) // m * m


def _bf_kernel(xr_ref, xi_ref, wr_ref, wi_ref, or_ref, oi_ref):
    """Compute one (batch, T-tile, W-tile) output block.

    xr_ref / xi_ref : (1, C, tT, Fp)   f32 real / imag planes of x
    wr_ref / wi_ref : (C, tW, Fp)      f32 real / imag planes of the weights
    or_ref / oi_ref : (1, tT, tW, Fp)  f32 real / imag planes of the output
    """
    n_ch = xr_ref.shape[1]
    # Statically unrolled FMA accumulation over the mic channels.  The output
    # VMEM block itself is the accumulator (there is no cross-grid-step
    # reduction axis), so no extra scratch is needed.
    for c in range(n_ch):
        xr_c = xr_ref[0, c][:, None, :]      # (tT, 1, Fp)   contiguous slab
        xi_c = xi_ref[0, c][:, None, :]
        wr_c = wr_ref[c][None, :, :]         # (1, tW, Fp)   contiguous slab
        wi_c = wi_ref[c][None, :, :]
        # conj(w) * x = (wr - i*wi) * (xr + i*xi)
        term_r = wr_c * xr_c + wi_c * xi_c   # (tT, tW, Fp)
        term_i = wr_c * xi_c - wi_c * xr_c
        if c == 0:
            or_ref[0] = term_r
            oi_ref[0] = term_i
        else:
            or_ref[0] += term_r
            oi_ref[0] += term_i


def _tile_bytes(t_tile, w_tile, n_ch, f_pad):
    # real+imag planes, double-buffered pipeline buffers, f32.
    x_b = 2 * 2 * n_ch * t_tile * f_pad * 4
    w_b = 2 * 2 * n_ch * w_tile * f_pad * 4
    o_b = 2 * 2 * t_tile * w_tile * f_pad * 4
    return x_b + w_b + o_b


def _plan_tiles(T, W, n_ch, f_pad, t_tile, w_tile, budget=_VMEM_TILE_BUDGET):
    """Pick multiple-of-8 time / beam tiles whose working set fits the budget."""
    cap_t = _round_up(T, _SUBLANE)
    cap_w = _round_up(W, _SUBLANE)
    if w_tile is None:
        w_tile = min(cap_w, 128)
        while w_tile > _SUBLANE and _tile_bytes(_SUBLANE, w_tile, n_ch, f_pad) > budget:
            w_tile -= _SUBLANE
    else:
        w_tile = min(_round_up(w_tile, _SUBLANE), cap_w)
    if t_tile is None:
        t_tile = min(cap_t, 512)
        while t_tile > _SUBLANE and _tile_bytes(t_tile, w_tile, n_ch, f_pad) > budget:
            t_tile -= _SUBLANE
    else:
        t_tile = min(_round_up(t_tile, _SUBLANE), cap_t)
    return t_tile, w_tile


def beamform_planes(xr, xi, wr, wi, *, t_tile, w_tile, flops_hint=None):
    """Run the beamforming kernel on split, padded, channel-major planes.

    xr, xi : (B, C, T_pad, F_pad) f32  with T_pad % t_tile == 0, F_pad % 128 == 0
    wr, wi : (C, W_pad, F_pad)    f32  with W_pad % w_tile == 0
    Returns (out_r, out_i), each (B, T_pad, W_pad, F_pad) f32.
    """
    B, C, T_pad, F_pad = xr.shape
    W_pad = wr.shape[1]
    assert T_pad % t_tile == 0 and W_pad % w_tile == 0 and F_pad % _LANE == 0

    grid = (B, T_pad // t_tile, W_pad // w_tile)

    # x block index is independent of the (innermost) W grid axis -> the x tile
    # stays resident across beam tiles; weights are small and stay resident
    # whenever there is a single W tile.
    x_spec = pl.BlockSpec((1, C, t_tile, F_pad), lambda b, ti, wj: (b, 0, ti, 0))
    w_spec = pl.BlockSpec((C, w_tile, F_pad), lambda b, ti, wj: (0, wj, 0))
    o_spec = pl.BlockSpec((1, t_tile, w_tile, F_pad),
                          lambda b, ti, wj: (b, ti, wj, 0))

    bytes_accessed = int(4 * (2 * xr.size + 2 * wr.size
                              + 2 * B * T_pad * W_pad * F_pad))
    if flops_hint is None:
        flops_hint = 8 * B * T_pad * W_pad * C * F_pad

    out_r, out_i = pl.pallas_call(
        _bf_kernel,
        out_shape=(
            jax.ShapeDtypeStruct((B, T_pad, W_pad, F_pad), jnp.float32),
            jax.ShapeDtypeStruct((B, T_pad, W_pad, F_pad), jnp.float32),
        ),
        grid_spec=pltpu.PrefetchScalarGridSpec(
            num_scalar_prefetch=0,
            grid=grid,
            in_specs=[x_spec, x_spec, w_spec, w_spec],
            out_specs=[o_spec, o_spec],
        ),
        compiler_params=pltpu.CompilerParams(
            # Every grid step writes a disjoint output block -> fully parallel;
            # on v7x the B / T-tile axes can be sharded across the 2 TensorCores.
            dimension_semantics=("parallel", "parallel", "parallel"),
            vmem_limit_bytes=_VMEM_LIMIT_BYTES,
        ),
        cost_estimate=pl.CostEstimate(
            flops=int(flops_hint), transcendentals=0,
            bytes_accessed=bytes_accessed),
    )(xr, xi, wr, wi)
    return out_r, out_i


def frontend_forward(x, ilens, bf_weight, direction_mask=None, *,
                     t_tile=None, w_tile=None):
    """JAX/Pallas equivalent of Frontend.forward.

    x:         complex64 array (B, T, C, F)  (batch, time, mics, freq bins)
    ilens:     int array / list of length B
    bf_weight: float32 array (2, Tw, C, F) (real/imag stacked); it is sliced
               [:, 2:-2] exactly like the PyTorch __init__ does after
               torch.load, giving W = Tw - 4 beams.
    Returns (out, ilens, mask) with out complex64 (B, T, W, F), mask = None.
    """
    ilens = jnp.asarray(ilens)
    assert x.shape[0] == ilens.shape[0], (x.shape[0], ilens.shape[0])
    if x.ndim != 4:
        # TODO(synk): the PyTorch module nominally accepts dim 3, but its own
        # permute(0, 2, 3, 1) requires 4-D, so only the 4-D path is implemented.
        raise ValueError(f"Input dim must be 4: {x.ndim}")

    B, T, C, F = x.shape
    w = bf_weight[:, 2:-2, :, :]          # (2, W, C, F) -- same trim as __init__
    W = w.shape[1]

    F_pad = _round_up(F, _LANE)           # lane-dense output stores
    t_tile, w_tile = _plan_tiles(T, W, C, F_pad, t_tile, w_tile)
    T_pad = _round_up(T, t_tile)
    W_pad = _round_up(W, w_tile)

    # Host-side prep.  The real/imag split is the single remaining extra HBM
    # pass over x; the channel-major transpose and the zero padding fuse into
    # that same pass.  Production pipelines should carry split real/imag
    # planes end-to-end and call beamform_planes() directly.
    # TODO(synk): XLA/Pallas has no complex64<->f32 bitcast, so a zero-copy
    # interleaved-complex path into the kernel is not available.
    def _prep_x(p):                        # (B,T,C,F) f32 -> (B,C,T_pad,F_pad)
        p = jnp.transpose(p, (0, 2, 1, 3))
        return jnp.pad(p, ((0, 0), (0, 0), (0, T_pad - T), (0, F_pad - F)))

    xr = _prep_x(jnp.real(x).astype(jnp.float32))
    xi = _prep_x(jnp.imag(x).astype(jnp.float32))

    def _prep_w(p):                        # (W,C,F) -> (C,W_pad,F_pad) f32
        p = jnp.transpose(p, (1, 0, 2)).astype(jnp.float32)
        return jnp.pad(p, ((0, 0), (0, W_pad - W), (0, F_pad - F)))

    wr = _prep_w(w[0])
    wi = _prep_w(w[1])

    out_r, out_i = beamform_planes(xr, xi, wr, wi,
                                   t_tile=t_tile, w_tile=w_tile,
                                   flops_hint=8 * B * T * W * C * F)

    # Strip the T / W / F padding and merge back to complex64 (module parity).
    out = jax.lax.complex(out_r[:, :T, :W, :F], out_i[:, :T, :W, :F])
    mask = None
    return out, ilens, mask


if __name__ == "__main__":
    # Small deterministic shapes chosen to exercise every tiling path:
    #   B=2 batches, T=12 frames (padded to 16 -> two time tiles of 8),
    #   C=4 mics, F=16 freq bins (lane-padded to 128),
    #   Tw=20 -> W=16 beams (two beam tiles of 8).
    B, T, C, F = 2, 12, 4, 16
    Tw = 20
    W = Tw - 4

    key = jax.random.PRNGKey(0)
    k1, k2, k3 = jax.random.split(key, 3)

    xr = jax.random.normal(k1, (B, T, C, F), dtype=jnp.float32)
    xi = jax.random.normal(k2, (B, T, C, F), dtype=jnp.float32)
    x = jax.lax.complex(xr, xi)                        # complex64 STFT features

    # Deterministic synthetic beamforming weights, shape (2, Tw, C, F)
    # (stands in for torch.load(bf_weight); no file I/O).
    bf_weight = jax.random.normal(k3, (2, Tw, C, F), dtype=jnp.float32)

    ilens = jnp.array([T, T - 2], dtype=jnp.int32)

    out, out_ilens, mask = frontend_forward(x, ilens, bf_weight,
                                            t_tile=8, w_tile=8)
    out = jax.block_until_ready(out)

    # Pure-JAX reference: out[b,t,w,f] = sum_c conj(weight[w,c,f]) * x[b,t,c,f]
    w_c = jax.lax.complex(bf_weight[0, 2:-2], bf_weight[1, 2:-2])   # (W, C, F)
    ref = jnp.einsum("wcf,btcf->btwf", jnp.conj(w_c), x)

    assert out.shape == (B, T, W, F), out.shape
    assert out.dtype == jnp.complex64, out.dtype
    assert mask is None
    assert jnp.array_equal(out_ilens, ilens)
    assert jnp.allclose(out, ref, atol=1e-4, rtol=1e-4)

    print("KERNEL_OK")
</pallas_src>

<mosaic_0001>
module attributes {stable_mosaic.version = 11 : i64} {
  func.func @_bf_kernel(%arg0: i32, %arg1: i32, %arg2: i32, %arg3: memref<1x4x8x128xf32, #tpu.memory_space<vmem>>, %arg4: memref<1x4x8x128xf32, #tpu.memory_space<vmem>>, %arg5: memref<4x8x128xf32, #tpu.memory_space<vmem>>, %arg6: memref<4x8x128xf32, #tpu.memory_space<vmem>>, %arg7: memref<1x8x8x128xf32, #tpu.memory_space<vmem>>, %arg8: memref<1x8x8x128xf32, #tpu.memory_space<vmem>>) attributes {dimension_semantics = [#tpu.dimension_semantics<parallel>, #tpu.dimension_semantics<parallel>, #tpu.dimension_semantics<parallel>], iteration_bounds = array<i64: 2, 2, 2>, scalar_prefetch = 0 : i64, scratch_operands = 0 : i64, tpu.core_type = #tpu.core_type<tc>, window_params = [{transform_indices = @transform_0, window_bounds = array<i64: 1, 4, 8, 128>}, {transform_indices = @transform_1, window_bounds = array<i64: 1, 4, 8, 128>}, {transform_indices = @transform_2, window_bounds = array<i64: 4, 8, 128>}, {transform_indices = @transform_3, window_bounds = array<i64: 4, 8, 128>}, {transform_indices = @transform_4, window_bounds = array<i64: 1, 8, 8, 128>}, {transform_indices = @transform_5, window_bounds = array<i64: 1, 8, 8, 128>}]} {
    %c0 = arith.constant 0 : index
    %c0_0 = arith.constant 0 : index
    %c0_1 = arith.constant 0 : index
    %c0_2 = arith.constant 0 : index
    %0 = vector.load %arg3[%c0, %c0_0, %c0_1, %c0_2] : memref<1x4x8x128xf32, #tpu.memory_space<vmem>>, vector<1x1x8x128xf32>
    %1 = vector.shape_cast %0 : vector<1x1x8x128xf32> to vector<8x128xf32>
    %2 = vector.shape_cast %1 : vector<8x128xf32> to vector<8x1x128xf32>
    %c0_3 = arith.constant 0 : index
    %c0_4 = arith.constant 0 : index
    %c0_5 = arith.constant 0 : index
    %c0_6 = arith.constant 0 : index
    %3 = vector.load %arg4[%c0_3, %c0_4, %c0_5, %c0_6] : memref<1x4x8x128xf32, #tpu.memory_space<vmem>>, vector<1x1x8x128xf32>
    %4 = vector.shape_cast %3 : vector<1x1x8x128xf32> to vector<8x128xf32>
    %5 = vector.shape_cast %4 : vector<8x128xf32> to vector<8x1x128xf32>
    %c0_7 = arith.constant 0 : index
    %c0_8 = arith.constant 0 : index
    %c0_9 = arith.constant 0 : index
    %6 = vector.load %arg5[%c0_7, %c0_8, %c0_9] : memref<4x8x128xf32, #tpu.memory_space<vmem>>, vector<1x8x128xf32>
    %7 = vector.shape_cast %6 : vector<1x8x128xf32> to vector<8x128xf32>
    %8 = vector.shape_cast %7 : vector<8x128xf32> to vector<1x8x128xf32>
    %c0_10 = arith.constant 0 : index
    %c0_11 = arith.constant 0 : index
    %c0_12 = arith.constant 0 : index
    %9 = vector.load %arg6[%c0_10, %c0_11, %c0_12] : memref<4x8x128xf32, #tpu.memory_space<vmem>>, vector<1x8x128xf32>
    %10 = vector.shape_cast %9 : vector<1x8x128xf32> to vector<8x128xf32>
    %11 = vector.shape_cast %10 : vector<8x128xf32> to vector<1x8x128xf32>
    %12 = vector.broadcast %8 : vector<1x8x128xf32> to vector<8x8x128xf32>
    %13 = vector.broadcast %2 : vector<8x1x128xf32> to vector<8x8x128xf32>
    %14 = arith.mulf %12, %13 : vector<8x8x128xf32>
    %15 = vector.broadcast %11 : vector<1x8x128xf32> to vector<8x8x128xf32>
    %16 = vector.broadcast %5 : vector<8x1x128xf32> to vector<8x8x128xf32>
    %17 = arith.mulf %15, %16 : vector<8x8x128xf32>
    %18 = arith.addf %14, %17 : vector<8x8x128xf32>
    %19 = vector.broadcast %8 : vector<1x8x128xf32> to vector<8x8x128xf32>
    %20 = vector.broadcast %5 : vector<8x1x128xf32> to vector<8x8x128xf32>
    %21 = arith.mulf %19, %20 : vector<8x8x128xf32>
    %22 = vector.broadcast %11 : vector<1x8x128xf32> to vector<8x8x128xf32>
    %23 = vector.broadcast %2 : vector<8x1x128xf32> to vector<8x8x128xf32>
    %24 = arith.mulf %22, %23 : vector<8x8x128xf32>
    %25 = arith.subf %21, %24 : vector<8x8x128xf32>
    %c0_13 = arith.constant 0 : index
    %c0_14 = arith.constant 0 : index
    %c0_15 = arith.constant 0 : index
    %c0_16 = arith.constant 0 : index
    %26 = vector.load %arg7[%c0_13, %c0_14, %c0_15, %c0_16] : memref<1x8x8x128xf32, #tpu.memory_space<vmem>>, vector<1x8x8x128xf32>
    %27 = vector.shape_cast %26 : vector<1x8x8x128xf32> to vector<8x8x128xf32>
    %28 = vector.shape_cast %18 : vector<8x8x128xf32> to vector<1x8x8x128xf32>
    tpu.vector_store %arg7[%c0_13, %c0_14, %c0_15, %c0_16], %28 {strides = array<i32>} : memref<1x8x8x128xf32, #tpu.memory_space<vmem>>, vector<1x8x8x128xf32>,
    %c0_17 = arith.constant 0 : index
    %c0_18 = arith.constant 0 : index
    %c0_19 = arith.constant 0 : index
    %c0_20 = arith.constant 0 : index
    %29 = vector.load %arg8[%c0_17, %c0_18, %c0_19, %c0_20] : memref<1x8x8x128xf32, #tpu.memory_space<vmem>>, vector<1x8x8x128xf32>
    %30 = vector.shape_cast %29 : vector<1x8x8x128xf32> to vector<8x8x128xf32>
    %31 = vector.shape_cast %25 : vector<8x8x128xf32> to vector<1x8x8x128xf32>
    tpu.vector_store %arg8[%c0_17, %c0_18, %c0_19, %c0_20], %31 {strides = array<i32>} : memref<1x8x8x128xf32, #tpu.memory_space<vmem>>, vector<1x8x8x128xf32>,
    %c0_21 = arith.constant 0 : index
    %c1 = arith.constant 1 : index
    %c0_22 = arith.constant 0 : index
    %c0_23 = arith.constant 0 : index
    %32 = vector.load %arg3[%c0_21, %c1, %c0_22, %c0_23] : memref<1x4x8x128xf32, #tpu.memory_space<vmem>>, vector<1x1x8x128xf32>
    %33 = vector.shape_cast %32 : vector<1x1x8x128xf32> to vector<8x128xf32>
    %34 = vector.shape_cast %33 : vector<8x128xf32> to vector<8x1x128xf32>
    %c0_24 = arith.constant 0 : index
    %c1_25 = arith.constant 1 : index
    %c0_26 = arith.constant 0 : index
    %c0_27 = arith.constant 0 : index
    %35 = vector.load %arg4[%c0_24, %c1_25, %c0_26, %c0_27] : memref<1x4x8x128xf32, #tpu.memory_space<vmem>>, vector<1x1x8x128xf32>
    %36 = vector.shape_cast %35 : vector<1x1x8x128xf32> to vector<8x128xf32>
    %37 = vector.shape_cast %36 : vector<8x128xf32> to vector<8x1x128xf32>
    %c1_28 = arith.constant 1 : index
    %c0_29 = arith.constant 0 : index
    %c0_30 = arith.constant 0 : index
    %38 = vector.load %arg5[%c1_28, %c0_29, %c0_30] : memref<4x8x128xf32, #tpu.memory_space<vmem>>, vector<1x8x128xf32>
    %39 = vector.shape_cast %38 : vector<1x8x128xf32> to vector<8x128xf32>
    %40 = vector.shape_cast %39 : vector<8x128xf32> to vector<1x8x128xf32>
    %c1_31 = arith.constant 1 : index
    %c0_32 = arith.constant 0 : index
    %c0_33 = arith.constant 0 : index
    %41 = vector.load %arg6[%c1_31, %c0_32, %c0_33] : memref<4x8x128xf32, #tpu.memory_space<vmem>>, vector<1x8x128xf32>
    %42 = vector.shape_cast %41 : vector<1x8x128xf32> to vector<8x128xf32>
    %43 = vector.shape_cast %42 : vector<8x128xf32> to vector<1x8x128xf32>
    %44 = vector.broadcast %40 : vector<1x8x128xf32> to vector<8x8x128xf32>
    %45 = vector.broadcast %34 : vector<8x1x128xf32> to vector<8x8x128xf32>
    %46 = arith.mulf %44, %45 : vector<8x8x128xf32>
    %47 = vector.broadcast %43 : vector<1x8x128xf32> to vector<8x8x128xf32>
    %48 = vector.broadcast %37 : vector<8x1x128xf32> to vector<8x8x128xf32>
    %49 = arith.mulf %47, %48 : vector<8x8x128xf32>
    %50 = arith.addf %46, %49 : vector<8x8x128xf32>
    %51 = vector.broadcast %40 : vector<1x8x128xf32> to vector<8x8x128xf32>
    %52 = vector.broadcast %37 : vector<8x1x128xf32> to vector<8x8x128xf32>
    %53 = arith.mulf %51, %52 : vector<8x8x128xf32>
    %54 = vector.broadcast %43 : vector<1x8x128xf32> to vector<8x8x128xf32>
    %55 = vector.broadcast %34 : vector<8x1x128xf32> to vector<8x8x128xf32>
    %56 = arith.mulf %54, %55 : vector<8x8x128xf32>
    %57 = arith.subf %53, %56 : vector<8x8x128xf32>
    %c0_34 = arith.constant 0 : index
    %c0_35 = arith.constant 0 : index
    %c0_36 = arith.constant 0 : index
    %c0_37 = arith.constant 0 : index
    %58 = vector.load %arg7[%c0_34, %c0_35, %c0_36, %c0_37] : memref<1x8x8x128xf32, #tpu.memory_space<vmem>>, vector<1x8x8x128xf32>
    %59 = vector.shape_cast %58 : vector<1x8x8x128xf32> to vector<8x8x128xf32>
    %60 = arith.addf %59, %50 : vector<8x8x128xf32>
    %c0_38 = arith.constant 0 : index
    %c0_39 = arith.constant 0 : index
    %c0_40 = arith.constant 0 : index
    %c0_41 = arith.constant 0 : index
    %61 = vector.load %arg7[%c0_38, %c0_39, %c0_40, %c0_41] : memref<1x8x8x128xf32, #tpu.memory_space<vmem>>, vector<1x8x8x128xf32>
    %62 = vector.shape_cast %61 : vector<1x8x8x128xf32> to vector<8x8x128xf32>
    %63 = vector.shape_cast %60 : vector<8x8x128xf32> to vector<1x8x8x128xf32>
    tpu.vector_store %arg7[%c0_38, %c0_39, %c0_40, %c0_41], %63 {strides = array<i32>} : memref<1x8x8x128xf32, #tpu.memory_space<vmem>>, vector<1x8x8x128xf32>,
    %c0_42 = arith.constant 0 : index
    %c0_43 = arith.constant 0 : index
    %c0_44 = arith.constant 0 : index
    %c0_45 = arith.constant 0 : index
    %64 = vector.load %arg8[%c0_42, %c0_43, %c0_44, %c0_45] : memref<1x8x8x128xf32, #tpu.memory_space<vmem>>, vector<1x8x8x128xf32>
    %65 = vector.shape_cast %64 : vector<1x8x8x128xf32> to vector<8x8x128xf32>
    %66 = arith.addf %65, %57 : vector<8x8x128xf32>
    %c0_46 = arith.constant 0 : index
    %c0_47 = arith.constant 0 : index
    %c0_48 = arith.constant 0 : index
    %c0_49 = arith.constant 0 : index
    %67 = vector.load %arg8[%c0_46, %c0_47, %c0_48, %c0_49] : memref<1x8x8x128xf32, #tpu.memory_space<vmem>>, vector<1x8x8x128xf32>
    %68 = vector.shape_cast %67 : vector<1x8x8x128xf32> to vector<8x8x128xf32>
    %69 = vector.shape_cast %66 : vector<8x8x128xf32> to vector<1x8x8x128xf32>
    tpu.vector_store %arg8[%c0_46, %c0_47, %c0_48, %c0_49], %69 {strides = array<i32>} : memref<1x8x8x128xf32, #tpu.memory_space<vmem>>, vector<1x8x8x128xf32>,
    %c0_50 = arith.constant 0 : index
    %c2 = arith.constant 2 : index
    %c0_51 = arith.constant 0 : index
    %c0_52 = arith.constant 0 : index
    %70 = vector.load %arg3[%c0_50, %c2, %c0_51, %c0_52] : memref<1x4x8x128xf32, #tpu.memory_space<vmem>>, vector<1x1x8x128xf32>
    %71 = vector.shape_cast %70 : vector<1x1x8x128xf32> to vector<8x128xf32>
    %72 = vector.shape_cast %71 : vector<8x128xf32> to vector<8x1x128xf32>
    %c0_53 = arith.constant 0 : index
    %c2_54 = arith.constant 2 : index
    %c0_55 = arith.constant 0 : index
    %c0_56 = arith.constant 0 : index
    %73 = vector.load %arg4[%c0_53, %c2_54, %c0_55, %c0_56] : memref<1x4x8x128xf32, #tpu.memory_space<vmem>>, vector<1x1x8x128xf32>
    %74 = vector.shape_cast %73 : vector<1x1x8x128xf32> to vector<8x128xf32>
    %75 = vector.shape_cast %74 : vector<8x128xf32> to vector<8x1x128xf32>
    %c2_57 = arith.constant 2 : index
    %c0_58 = arith.constant 0 : index
    %c0_59 = arith.constant 0 : index
    %76 = vector.load %arg5[%c2_57, %c0_58, %c0_59] : memref<4x8x128xf32, #tpu.memory_space<vmem>>, vector<1x8x128xf32>
    %77 = vector.shape_cast %76 : vector<1x8x128xf32> to vector<8x128xf32>
    %78 = vector.shape_cast %77 : vector<8x128xf32> to vector<1x8x128xf32>
    %c2_60 = arith.constant 2 : index
    %c0_61 = arith.constant 0 : index
    %c0_62 = arith.constant 0 : index
    %79 = vector.load %arg6[%c2_60, %c0_61, %c0_62] : memref<4x8x128xf32, #tpu.memory_space<vmem>>, vector<1x8x128xf32>
    %80 = vector.shape_cast %79 : vector<1x8x128xf32> to vector<8x128xf32>
    %81 = vector.shape_cast %80 : vector<8x128xf32> to vector<1x8x128xf32>
    %82 = vector.broadcast %78 : vector<1x8x128xf32> to vector<8x8x128xf32>
    %83 = vector.broadcast %72 : vector<8x1x128xf32> to vector<8x8x128xf32>
    %84 = arith.mulf %82, %83 : vector<8x8x128xf32>
    %85 = vector.broadcast %81 : vector<1x8x128xf32> to vector<8x8x128xf32>
    %86 = vector.broadcast %75 : vector<8x1x128xf32> to vector<8x8x128xf32>
    %87 = arith.mulf %85, %86 : vector<8x8x128xf32>
    %88 = arith.addf %84, %87 : vector<8x8x128xf32>
    %89 = vector.broadcast %78 : vector<1x8x128xf32> to vector<8x8x128xf32>
    %90 = vector.broadcast %75 : vector<8x1x128xf32> to vector<8x8x128xf32>
    %91 = arith.mulf %89, %90 : vector<8x8x128xf32>
    %92 = vector.broadcast %81 : vector<1x8x128xf32> to vector<8x8x128xf32>
    %93 = vector.broadcast %72 : vector<8x1x128xf32> to vector<8x8x128xf32>
    %94 = arith.mulf %92, %93 : vector<8x8x128xf32>
    %95 = arith.subf %91, %94 : vector<8x8x128xf32>
    %c0_63 = arith.constant 0 : index
    %c0_64 = arith.constant 0 : index
    %c0_65 = arith.constant 0 : index
    %c0_66 = arith.constant 0 : index
    %96 = vector.load %arg7[%c0_63, %c0_64, %c0_65, %c0_66] : memref<1x8x8x128xf32, #tpu.memory_space<vmem>>, vector<1x8x8x128xf32>
    %97 = vector.shape_cast %96 : vector<1x8x8x128xf32> to vector<8x8x128xf32>
    %98 = arith.addf %97, %88 : vector<8x8x128xf32>
    %c0_67 = arith.constant 0 : index
    %c0_68 = arith.constant 0 : index
    %c0_69 = arith.constant 0 : index
    %c0_70 = arith.constant 0 : index
    %99 = vector.load %arg7[%c0_67, %c0_68, %c0_69, %c0_70] : memref<1x8x8x128xf32, #tpu.memory_space<vmem>>, vector<1x8x8x128xf32>
    %100 = vector.shape_cast %99 : vector<1x8x8x128xf32> to vector<8x8x128xf32>
    %101 = vector.shape_cast %98 : vector<8x8x128xf32> to vector<1x8x8x128xf32>
    tpu.vector_store %arg7[%c0_67, %c0_68, %c0_69, %c0_70], %101 {strides = array<i32>} : memref<1x8x8x128xf32, #tpu.memory_space<vmem>>, vector<1x8x8x128xf32>,
    %c0_71 = arith.constant 0 : index
    %c0_72 = arith.constant 0 : index
    %c0_73 = arith.constant 0 : index
    %c0_74 = arith.constant 0 : index
    %102 = vector.load %arg8[%c0_71, %c0_72, %c0_73, %c0_74] : memref<1x8x8x128xf32, #tpu.memory_space<vmem>>, vector<1x8x8x128xf32>
    %103 = vector.shape_cast %102 : vector<1x8x8x128xf32> to vector<8x8x128xf32>
    %104 = arith.addf %103, %95 : vector<8x8x128xf32>
    %c0_75 = arith.constant 0 : index
    %c0_76 = arith.constant 0 : index
    %c0_77 = arith.constant 0 : index
    %c0_78 = arith.constant 0 : index
    %105 = vector.load %arg8[%c0_75, %c0_76, %c0_77, %c0_78] : memref<1x8x8x128xf32, #tpu.memory_space<vmem>>, vector<1x8x8x128xf32>
    %106 = vector.shape_cast %105 : vector<1x8x8x128xf32> to vector<8x8x128xf32>
    %107 = vector.shape_cast %104 : vector<8x8x128xf32> to vector<1x8x8x128xf32>
    tpu.vector_store %arg8[%c0_75, %c0_76, %c0_77, %c0_78], %107 {strides = array<i32>} : memref<1x8x8x128xf32, #tpu.memory_space<vmem>>, vector<1x8x8x128xf32>,
    %c0_79 = arith.constant 0 : index
    %c3 = arith.constant 3 : index
    %c0_80 = arith.constant 0 : index
    %c0_81 = arith.constant 0 : index
    %108 = vector.load %arg3[%c0_79, %c3, %c0_80, %c0_81] : memref<1x4x8x128xf32, #tpu.memory_space<vmem>>, vector<1x1x8x128xf32>
    %109 = vector.shape_cast %108 : vector<1x1x8x128xf32> to vector<8x128xf32>
    %110 = vector.shape_cast %109 : vector<8x128xf32> to vector<8x1x128xf32>
    %c0_82 = arith.constant 0 : index
    %c3_83 = arith.constant 3 : index
    %c0_84 = arith.constant 0 : index
    %c0_85 = arith.constant 0 : index
    %111 = vector.load %arg4[%c0_82, %c3_83, %c0_84, %c0_85] : memref<1x4x8x128xf32, #tpu.memory_space<vmem>>, vector<1x1x8x128xf32>
    %112 = vector.shape_cast %111 : vector<1x1x8x128xf32> to vector<8x128xf32>
    %113 = vector.shape_cast %112 : vector<8x128xf32> to vector<8x1x128xf32>
    %c3_86 = arith.constant 3 : index
    %c0_87 = arith.constant 0 : index
    %c0_88 = arith.constant 0 : index
    %114 = vector.load %arg5[%c3_86, %c0_87, %c0_88] : memref<4x8x128xf32, #tpu.memory_space<vmem>>, vector<1x8x128xf32>
    %115 = vector.shape_cast %114 : vector<1x8x128xf32> to vector<8x128xf32>
    %116 = vector.shape_cast %115 : vector<8x128xf32> to vector<1x8x128xf32>
    %c3_89 = arith.constant 3 : index
    %c0_90 = arith.constant 0 : index
    %c0_91 = arith.constant 0 : index
    %117 = vector.load %arg6[%c3_89, %c0_90, %c0_91] : memref<4x8x128xf32, #tpu.memory_space<vmem>>, vector<1x8x128xf32>
    %118 = vector.shape_cast %117 : vector<1x8x128xf32> to vector<8x128xf32>
    %119 = vector.shape_cast %118 : vector<8x128xf32> to vector<1x8x128xf32>
    %120 = vector.broadcast %116 : vector<1x8x128xf32> to vector<8x8x128xf32>
    %121 = vector.broadcast %110 : vector<8x1x128xf32> to vector<8x8x128xf32>
    %122 = arith.mulf %120, %121 : vector<8x8x128xf32>
    %123 = vector.broadcast %119 : vector<1x8x128xf32> to vector<8x8x128xf32>
    %124 = vector.broadcast %113 : vector<8x1x128xf32> to vector<8x8x128xf32>
    %125 = arith.mulf %123, %124 : vector<8x8x128xf32>
    %126 = arith.addf %122, %125 : vector<8x8x128xf32>
    %127 = vector.broadcast %116 : vector<1x8x128xf32> to vector<8x8x128xf32>
    %128 = vector.broadcast %113 : vector<8x1x128xf32> to vector<8x8x128xf32>
    %129 = arith.mulf %127, %128 : vector<8x8x128xf32>
    %130 = vector.broadcast %119 : vector<1x8x128xf32> to vector<8x8x128xf32>
    %131 = vector.broadcast %110 : vector<8x1x128xf32> to vector<8x8x128xf32>
    %132 = arith.mulf %130, %131 : vector<8x8x128xf32>
    %133 = arith.subf %129, %132 : vector<8x8x128xf32>
    %c0_92 = arith.constant 0 : index
    %c0_93 = arith.constant 0 : index
    %c0_94 = arith.constant 0 : index
    %c0_95 = arith.constant 0 : index
    %134 = vector.load %arg7[%c0_92, %c0_93, %c0_94, %c0_95] : memref<1x8x8x128xf32, #tpu.memory_space<vmem>>, vector<1x8x8x128xf32>
    %135 = vector.shape_cast %134 : vector<1x8x8x128xf32> to vector<8x8x128xf32>
    %136 = arith.addf %135, %126 : vector<8x8x128xf32>
    %c0_96 = arith.constant 0 : index
    %c0_97 = arith.constant 0 : index
    %c0_98 = arith.constant 0 : index
    %c0_99 = arith.constant 0 : index
    %137 = vector.load %arg7[%c0_96, %c0_97, %c0_98, %c0_99] : memref<1x8x8x128xf32, #tpu.memory_space<vmem>>, vector<1x8x8x128xf32>
    %138 = vector.shape_cast %137 : vector<1x8x8x128xf32> to vector<8x8x128xf32>
    %139 = vector.shape_cast %136 : vector<8x8x128xf32> to vector<1x8x8x128xf32>
    tpu.vector_store %arg7[%c0_96, %c0_97, %c0_98, %c0_99], %139 {strides = array<i32>} : memref<1x8x8x128xf32, #tpu.memory_space<vmem>>, vector<1x8x8x128xf32>,
    %c0_100 = arith.constant 0 : index
    %c0_101 = arith.constant 0 : index
    %c0_102 = arith.constant 0 : index
    %c0_103 = arith.constant 0 : index
    %140 = vector.load %arg8[%c0_100, %c0_101, %c0_102, %c0_103] : memref<1x8x8x128xf32, #tpu.memory_space<vmem>>, vector<1x8x8x128xf32>
    %141 = vector.shape_cast %140 : vector<1x8x8x128xf32> to vector<8x8x128xf32>
    %142 = arith.addf %141, %133 : vector<8x8x128xf32>
    %c0_104 = arith.constant 0 : index
    %c0_105 = arith.constant 0 : index
    %c0_106 = arith.constant 0 : index
    %c0_107 = arith.constant 0 : index
    %143 = vector.load %arg8[%c0_104, %c0_105, %c0_106, %c0_107] : memref<1x8x8x128xf32, #tpu.memory_space<vmem>>, vector<1x8x8x128xf32>
    %144 = vector.shape_cast %143 : vector<1x8x8x128xf32> to vector<8x8x128xf32>
    %145 = vector.shape_cast %142 : vector<8x8x128xf32> to vector<1x8x8x128xf32>
    tpu.vector_store %arg8[%c0_104, %c0_105, %c0_106, %c0_107], %145 {strides = array<i32>} : memref<1x8x8x128xf32, #tpu.memory_space<vmem>>, vector<1x8x8x128xf32>,
    return
  }
  func.func @transform_0(%arg0: i32, %arg1: i32, %arg2: i32) -> (i32, i32, i32, i32) {
    %c0_i32 = arith.constant 0 : i32
    %c0_i32_0 = arith.constant 0 : i32
    %c0_i32_1 = arith.constant 0 : i32
    return %arg0, %c0_i32, %arg1, %c0_i32_0 : i32, i32, i32, i32
  }
  func.func @transform_1(%arg0: i32, %arg1: i32, %arg2: i32) -> (i32, i32, i32, i32) {
    %c0_i32 = arith.constant 0 : i32
    %c0_i32_0 = arith.constant 0 : i32
    %c0_i32_1 = arith.constant 0 : i32
    return %arg0, %c0_i32, %arg1, %c0_i32_0 : i32, i32, i32, i32
  }
  func.func @transform_2(%arg0: i32, %arg1: i32, %arg2: i32) -> (i32, i32, i32) {
    %c0_i32 = arith.constant 0 : i32
    %c0_i32_0 = arith.constant 0 : i32
    %c0_i32_1 = arith.constant 0 : i32
    return %c0_i32, %arg2, %c0_i32_0 : i32, i32, i32
  }
  func.func @transform_3(%arg0: i32, %arg1: i32, %arg2: i32) -> (i32, i32, i32) {
    %c0_i32 = arith.constant 0 : i32
    %c0_i32_0 = arith.constant 0 : i32
    %c0_i32_1 = arith.constant 0 : i32
    return %c0_i32, %arg2, %c0_i32_0 : i32, i32, i32
  }
  func.func @transform_4(%arg0: i32, %arg1: i32, %arg2: i32) -> (i32, i32, i32, i32) {
    %c0_i32 = arith.constant 0 : i32
    %c0_i32_0 = arith.constant 0 : i32
    return %arg0, %arg1, %arg2, %c0_i32 : i32, i32, i32, i32
  }
  func.func @transform_5(%arg0: i32, %arg1: i32, %arg2: i32) -> (i32, i32, i32, i32) {
    %c0_i32 = arith.constant 0 : i32
    %c0_i32_0 = arith.constant 0 : i32
    return %arg0, %arg1, %arg2, %c0_i32 : i32, i32, i32, i32
  }
}

</mosaic_0001>

<llo_original>
// kernel: tpu_custom_call.1
$region0: #{tpu_custom_call.1}
  #allocation0 [shape = 'u32[]', space=smem, size = 0x4, offset = 0x4, fixed_abs, tag = 'smem constant byte address 0x4 - core index']
  #allocation1 [shape = 'u32[144,128]{1,0:T(1,128)}', space=vmem, size = 0x12000, scoped, tag = 'internal scratch']
  %s0 = inlined_call_operand.hbm [shape: f32[2,4,16,128], index: 0, kind: input, shape index: {}]
  %s1 = inlined_call_operand.hbm [shape: f32[2,4,16,128], index: 1, kind: input, shape index: {}]
  %s2 = inlined_call_operand.hbm [shape: f32[4,16,128], index: 2, kind: input, shape index: {}]
  %s3 = inlined_call_operand.hbm [shape: f32[4,16,128], index: 3, kind: input, shape index: {}]
  %s4 = inlined_call_operand.hbm [shape: f32[2,16,16,128], index: 4, kind: output, shape index: {0}]
  %s5 = inlined_call_operand.hbm [shape: f32[2,16,16,128], index: 5, kind: output, shape index: {1}]
  %6 = xla_tuple %s4, %s5
  %s7 = sld [smem:[#allocation0]]
  $region73: #{tpu_custom_call.1} parent=0
    _
  %s9 = ssub.s32 1, %s7
  %s10 = scalar_select 0, %s9, %s7
  $region1: #{tpu_custom_call.1} parent=0
    #allocation2 [shape = 'u8[32768]{0}', space=vmem, size = 0x8000, scoped, tag = 'input window, operand 0']
    #allocation3 [shape = 's32[2]{0}', space=sflag, size = 0x8, scoped, tag = 'scoped memory for tpu_custom_call.1']
    #allocation4 [shape = 's32[2]{0}', space=sflag, size = 0x8, scoped, tag = 'scoped memory for tpu_custom_call.1']
    #allocation5 [shape = 'u8[32768]{0}', space=vmem, size = 0x8000, scoped, tag = 'input window, operand 1']
    #allocation6 [shape = 's32[2]{0}', space=sflag, size = 0x8, scoped, tag = 'scoped memory for tpu_custom_call.1']
    #allocation7 [shape = 'u8[32768]{0}', space=vmem, size = 0x8000, scoped, tag = 'input window, operand 2']
    #allocation8 [shape = 'u8[32768]{0}', space=vmem, size = 0x8000, scoped, tag = 'input window, operand 3']
    #allocation9 [shape = 's32[2]{0}', space=sflag, size = 0x8, scoped, tag = 'scoped memory for tpu_custom_call.1']
    #allocation10 [shape = 'u8[65536]{0}', space=vmem, size = 0x10000, scoped, tag = 'output window, operand 0']
    #allocation11 [shape = 'u8[65536]{0}', space=vmem, size = 0x10000, scoped, tag = 'output window, operand 1']
    #allocation12 [shape = 's32[2]{0}', space=sflag, size = 0x8, scoped, tag = 'scoped memory for tpu_custom_call.1']
    %11 = vsyncpa [#allocation3], 0
    %s12 = scalar_lea.sflag [#allocation3], 1
    %13 = vsyncpa %s12, 0
    %14 = vsyncpa [#allocation6], 0
    %s15 = scalar_lea.sflag [#allocation6], 1
    %16 = vsyncpa %s15, 0
    %17 = vsyncpa [#allocation9], 0
    %s18 = scalar_lea.sflag [#allocation9], 1
    %19 = vsyncpa %s18, 0
    %20 = vsyncpa [#allocation4], 0
    %s21 = scalar_lea.sflag [#allocation4], 1
    %22 = vsyncpa %s21, 0
    %23 = vsyncpa [#allocation12], 0
    %s24 = scalar_lea.sflag [#allocation12], 1
    %25 = vsyncpa %s24, 0
    loop: start=0, step=1, limit=10
    $region2: #{tpu_custom_call.1} parent=1 // loop_pre_header
      _
    $region3: #{tpu_custom_call.1} parent=1 // loop_header
      %s27 = sphi 0, %s31
      %p28 = scmp.ge.s32.totalorder %s27, 10
      %s34 = sphi 0, %s53
      %s35 = sphi 0, %s49
      %s36 = sphi 0, %s45
      %s37 = sphi 0, %s34
      %s38 = sphi 0, %s35
      %s39 = sphi 0, %s36
      %s40 = sphi 0, %s37
      %s41 = sphi 0, %s38
      %s42 = sphi 0, %s39
      %s58 = sphi 0, %s60
      %s61 = sphi 0, %s58
      %s62 = sphi 0, %s61
      %s78 = sphi 0, %s62
      %s86 = sphi 0, %s88
      %s89 = sphi 0, %s86
      %s90 = sphi 0, %s89
      %s106 = sphi 0, %s90
      %s112 = sphi 0, %s114
      %s115 = sphi 0, %s112
      %s116 = sphi 0, %s115
      %s132 = sphi 0, %s116
      %s138 = sphi 0, %s140
      %s141 = sphi 0, %s138
      %s142 = sphi 0, %s141
      %s158 = sphi 0, %s142
      %s168 = sphi 0, %s170
      %s171 = sphi 0, %s168
      %s172 = sphi 0, %s171
      %s188 = sphi 0, %s172
      %s198 = sphi 0, %s200
      %s201 = sphi 0, %s198
      %s202 = sphi 0, %s201
      %s218 = sphi 0, %s202
    $region4: #{tpu_custom_call.1} parent=1 // loop_header_branch
      %30 = sbr.rel (%p28) target = $region8
    $region5: #{tpu_custom_call.1} parent=1 // loop_body
      %s32 = ssub.s32 %s27, 1
      %s33 = ssub.s32 %s27, 2
      %s43 = sadd.s32 1, %s36
      %p44 = scmp.ge.s32.totalorder %s43, 2
      %s45 = scalar_select %p44, 0, %s43
      %s46 = sadd.s32 1, %s35
      %s47 = scalar_select %p44, %s46, %s35
      %p48 = scmp.ge.s32.totalorder %s47, 2
      %s49 = scalar_select %p48, 0, %s47
      %s50 = sadd.s32 1, %s34
      %s51 = scalar_select %p48, %s50, %s34
      %p52 = scmp.ge.s32.totalorder %s51, 2
      %s53 = scalar_select %p52, 0, %s51
      %s54 = ssub.s32 %s34, %s53
      %s55 = ssub.s32 %s35, %s49
      %s56 = sor.u32 %s54, %s55
      %p57 = scmp.eq.s32.totalorder %s56, 0
      %s59 = sadd.s32 %s58, 1
      %s60 = scalar_select %p57, %s58, %s59
      %p63 = pneg %p57
      %p64 = scmp.eq.s32.totalorder %s27, 7
      %p65 = por %p63, %p64
      %p66 = scmp.ne.s32.totalorder %s58, %s61
      %p67 = scmp.eq.s32.totalorder %s27, 0
      %p68 = por %p66, %p67
      %p69 = scmp.ne.s32.totalorder %s58, %s61
      %p70 = scmp.eq.s32.totalorder %s32, 7
      %p71 = por %p69, %p70
      %p72 = scmp.ne.s32.totalorder %s61, %s62
      %p73 = scmp.eq.s32.totalorder %s32, 0
      %p74 = por %p72, %p73
      %p75 = scmp.ne.s32.totalorder %s61, %s62
      %p76 = scmp.eq.s32.totalorder %s33, 7
      %p77 = por %p75, %p76
      %p79 = scmp.ne.s32.totalorder %s62, %s78
      %p80 = scmp.eq.s32.totalorder %s33, 0
      %p81 = por %p79, %p80
      %s82 = ssub.s32 %s34, %s53
      %s83 = ssub.s32 %s35, %s49
      %s84 = sor.u32 %s82, %s83
      %p85 = scmp.eq.s32.totalorder %s84, 0
      %s87 = sadd.s32 %s86, 1
      %s88 = scalar_select %p85, %s86, %s87
      %p91 = pneg %p85
      %p92 = scmp.eq.s32.totalorder %s27, 7
      %p93 = por %p91, %p92
      %p94 = scmp.ne.s32.totalorder %s86, %s89
      %p95 = scmp.eq.s32.totalorder %s27, 0
      %p96 = por %p94, %p95
      %p97 = scmp.ne.s32.totalorder %s86, %s89
      %p98 = scmp.eq.s32.totalorder %s32, 7
      %p99 = por %p97, %p98
      %p100 = scmp.ne.s32.totalorder %s89, %s90
      %p101 = scmp.eq.s32.totalorder %s32, 0
      %p102 = por %p100, %p101
      %p103 = scmp.ne.s32.totalorder %s89, %s90
      %p104 = scmp.eq.s32.totalorder %s33, 7
      %p105 = por %p103, %p104
      %p107 = scmp.ne.s32.totalorder %s90, %s106
      %p108 = scmp.eq.s32.totalorder %s33, 0
      %p109 = por %p107, %p108
      %s110 = ssub.s32 %s36, %s45
      %p111 = scmp.eq.s32.totalorder %s110, 0
      %s113 = sadd.s32 %s112, 1
      %s114 = scalar_select %p111, %s112, %s113
      %p117 = pneg %p111
      %p118 = scmp.eq.s32.totalorder %s27, 7
      %p119 = por %p117, %p118
      %p120 = scmp.ne.s32.totalorder %s112, %s115
      %p121 = scmp.eq.s32.totalorder %s27, 0
      %p122 = por %p120, %p121
      %p123 = scmp.ne.s32.totalorder %s112, %s115
      %p124 = scmp.eq.s32.totalorder %s32, 7
      %p125 = por %p123, %p124
      %p126 = scmp.ne.s32.totalorder %s115, %s116
      %p127 = scmp.eq.s32.totalorder %s32, 0
      %p128 = por %p126, %p127
      %p129 = scmp.ne.s32.totalorder %s115, %s116
      %p130 = scmp.eq.s32.totalorder %s33, 7
      %p131 = por %p129, %p130
      %p133 = scmp.ne.s32.totalorder %s116, %s132
      %p134 = scmp.eq.s32.totalorder %s33, 0
      %p135 = por %p133, %p134
      %s136 = ssub.s32 %s36, %s45
      %p137 = scmp.eq.s32.totalorder %s136, 0
      %s139 = sadd.s32 %s138, 1
      %s140 = scalar_select %p137, %s138, %s139
      %p143 = pneg %p137
      %p144 = scmp.eq.s32.totalorder %s27, 7
      %p145 = por %p143, %p144
      %p146 = scmp.ne.s32.totalorder %s138, %s141
      %p147 = scmp.eq.s32.totalorder %s27, 0
      %p148 = por %p146, %p147
      %p149 = scmp.ne.s32.totalorder %s138, %s141
      %p150 = scmp.eq.s32.totalorder %s32, 7
      %p151 = por %p149, %p150
      %p152 = scmp.ne.s32.totalorder %s141, %s142
      %p153 = scmp.eq.s32.totalorder %s32, 0
      %p154 = por %p152, %p153
      %p155 = scmp.ne.s32.totalorder %s141, %s142
      %p156 = scmp.eq.s32.totalorder %s33, 7
      %p157 = por %p155, %p156
      %p159 = scmp.ne.s32.totalorder %s142, %s158
      %p160 = scmp.eq.s32.totalorder %s33, 0
      %p161 = por %p159, %p160
      %s162 = ssub.s32 %s34, %s53
      %s163 = ssub.s32 %s35, %s49
      %s164 = sor.u32 %s162, %s163
      %s165 = ssub.s32 %s36, %s45
      %s166 = sor.u32 %s164, %s165
      %p167 = scmp.eq.s32.totalorder %s166, 0
      %s169 = sadd.s32 %s168, 1
      %s170 = scalar_select %p167, %s168, %s169
      %p173 = pneg %p167
      %p174 = scmp.eq.s32.totalorder %s27, 7
      %p175 = por %p173, %p174
      %p176 = scmp.ne.s32.totalorder %s168, %s171
      %p177 = scmp.eq.s32.totalorder %s27, 0
      %p178 = por %p176, %p177
      %p179 = scmp.ne.s32.totalorder %s168, %s171
      %p180 = scmp.eq.s32.totalorder %s32, 7
      %p181 = por %p179, %p180
      %p182 = scmp.ne.s32.totalorder %s171, %s172
      %p183 = scmp.eq.s32.totalorder %s32, 0
      %p184 = por %p182, %p183
      %p185 = scmp.ne.s32.totalorder %s171, %s172
      %p186 = scmp.eq.s32.totalorder %s33, 7
      %p187 = por %p185, %p186
      %p189 = scmp.ne.s32.totalorder %s172, %s188
      %p190 = scmp.eq.s32.totalorder %s33, 0
      %p191 = por %p189, %p190
      %s192 = ssub.s32 %s34, %s53
      %s193 = ssub.s32 %s35, %s49
      %s194 = sor.u32 %s192, %s193
      %s195 = ssub.s32 %s36, %s45
      %s196 = sor.u32 %s194, %s195
      %p197 = scmp.eq.s32.totalorder %s196, 0
      %s199 = sadd.s32 %s198, 1
      %s200 = scalar_select %p197, %s198, %s199
      %p203 = pneg %p197
      %p204 = scmp.eq.s32.totalorder %s27, 7
      %p205 = por %p203, %p204
      %p206 = scmp.ne.s32.totalorder %s198, %s201
      %p207 = scmp.eq.s32.totalorder %s27, 0
      %p208 = por %p206, %p207
      %p209 = scmp.ne.s32.totalorder %s198, %s201
      %p210 = scmp.eq.s32.totalorder %s32, 7
      %p211 = por %p209, %p210
      %p212 = scmp.ne.s32.totalorder %s201, %s202
      %p213 = scmp.eq.s32.totalorder %s32, 0
      %p214 = por %p212, %p213
      %p215 = scmp.ne.s32.totalorder %s201, %s202
      %p216 = scmp.eq.s32.totalorder %s33, 7
      %p217 = por %p215, %p216
      %p219 = scmp.ne.s32.totalorder %s202, %s218
      %p220 = scmp.eq.s32.totalorder %s33, 0
      %p221 = por %p219, %p220
      %p222 = scmp.le.s32.totalorder 1, %s27
      %p223 = scmp.lt.s32.totalorder %s27, 9
      %p224 = pnand %p222, %p223
      %p225 = pneg %p224
      // Predicated region
      $region9: #{tpu_custom_call.1} parent=5 // pred_check
        _
      $region10: #{tpu_custom_call.1} parent=5 // pred_check_branch
        %227 = sbr.rel (%p224) target = $region12
      $region11: #{tpu_custom_call.1} parent=5 // pred_region
        %s228 = ssub.s32 %s27, 1
      $region12: #{tpu_custom_call.1} parent=5 // pred_fallthru
        _
      %p229 = scmp.lt.s32.totalorder %s27, 8
      // Predicated region
      $region13: #{tpu_custom_call.1} parent=5 // pred_check
        %p230 = pneg %p229
      $region14: #{tpu_custom_call.1} parent=5 // pred_check_branch
        %232 = sbr.rel (%p230) target = $region16
      $region15: #{tpu_custom_call.1} parent=5 // pred_region
        // Predicated region
        $region17: #{tpu_custom_call.1} parent=15 // pred_check
          %p233 = pneg %p68
        $region18: #{tpu_custom_call.1} parent=15 // pred_check_branch
          %235 = sbr.rel (%p233) target = $region20
        $region19: #{tpu_custom_call.1} parent=15 // pred_region
          %s236 = sand.u32 %s58, 1
          %s237 = scalar_lea.sflag [#allocation3], %s236
          %s238 = sand.u32 %s58, 1
          %s239 = smul.addr %s238, 32
          %s240 = scalar_lea.vmem [#allocation2], %s239
          %s242 = ssub.s32 512, 512
          %243 = vsyncadd %s237, %s242
          %s244 = smul.addr %s34, 8
          %s245 = sadd.s32 %s35, %s244
          %s246 = smul.addr %s245, 128
          %s247 = scalar_lea.hbm %s0, %s246
          %s248 = sshll.u32 %s240, 4
          %s249 = int_to_ptr.vmem [resolvable:$true] %s248
          %254 = dma.hbm_to_vmem [thread:$0]  %s247, 512, %s249, %s237, 256, 128, 8
        $region20: #{tpu_custom_call.1} parent=15 // pred_fallthru
          _
        // Predicated region
        $region21: #{tpu_custom_call.1} parent=15 // pred_check
          %p255 = pneg %p96
        $region22: #{tpu_custom_call.1} parent=15 // pred_check_branch
          %257 = sbr.rel (%p255) target = $region24
        $region23: #{tpu_custom_call.1} parent=15 // pred_region
          %s258 = sand.u32 %s27, 1
          %s259 = scalar_lea.sflag [#allocation6], %s258
          %s260 = sand.u32 %s86, 1
          %s261 = smul.addr %s260, 32
          %s262 = scalar_lea.vmem [#allocation5], %s261
          %s264 = ssub.s32 512, 512
          %265 = vsyncadd %s259, %s264
          %s266 = smul.addr %s34, 8
          %s267 = sadd.s32 %s35, %s266
          %s268 = smul.addr %s267, 128
          %s269 = scalar_lea.hbm %s1, %s268
          %s270 = sshll.u32 %s262, 4
          %s271 = int_to_ptr.vmem [resolvable:$true] %s270
          %276 = dma.hbm_to_vmem [thread:$0]  %s269, 512, %s271, %s259, 256, 128, 8
        $region24: #{tpu_custom_call.1} parent=15 // pred_fallthru
          _
        // Predicated region
        $region25: #{tpu_custom_call.1} parent=15 // pred_check
          %p277 = pneg %p122
        $region26: #{tpu_custom_call.1} parent=15 // pred_check_branch
          %279 = sbr.rel (%p277) target = $region28
        $region27: #{tpu_custom_call.1} parent=15 // pred_region
          %s280 = sand.u32 %s27, 1
          %s281 = scalar_lea.sflag [#allocation6], %s280
          %s282 = sand.u32 %s112, 1
          %s283 = smul.addr %s282, 32
          %s284 = scalar_lea.vmem [#allocation7], %s283
          %s286 = ssub.s32 512, 512
          %287 = vsyncadd %s281, %s286
          %s288 = smul.addr %s36, 128
          %s289 = scalar_lea.hbm %s2, %s288
          %s290 = sshll.u32 %s284, 4
          %s291 = int_to_ptr.vmem [resolvable:$true] %s290
          %296 = dma.hbm_to_vmem [thread:$0]  %s289, 512, %s291, %s281, 256, 128, 8
        $region28: #{tpu_custom_call.1} parent=15 // pred_fallthru
          _
        // Predicated region
        $region29: #{tpu_custom_call.1} parent=15 // pred_check
          %p297 = pneg %p148
        $region30: #{tpu_custom_call.1} parent=15 // pred_check_branch
          %299 = sbr.rel (%p297) target = $region32
        $region31: #{tpu_custom_call.1} parent=15 // pred_region
          %s300 = sand.u32 %s138, 1
          %s301 = scalar_lea.sflag [#allocation9], %s300
          %s302 = sand.u32 %s138, 1
          %s303 = smul.addr %s302, 32
          %s304 = scalar_lea.vmem [#allocation8], %s303
          %s306 = ssub.s32 512, 512
          %307 = vsyncadd %s301, %s306
          %s308 = smul.addr %s36, 128
          %s309 = scalar_lea.hbm %s3, %s308
          %s310 = sshll.u32 %s304, 4
          %s311 = int_to_ptr.vmem [resolvable:$true] %s310
          %316 = dma.hbm_to_vmem [thread:$0]  %s309, 512, %s311, %s301, 256, 128, 8
        $region32: #{tpu_custom_call.1} parent=15 // pred_fallthru
          _
      $region16: #{tpu_custom_call.1} parent=5 // pred_fallthru
        _
      %p317 = scmp.le.s32.totalorder 1, %s27
      %p318 = scmp.lt.s32.totalorder %s27, 9
      %p319 = pnand %p317, %p318
      %p320 = pneg %p319
      // Predicated region
      $region33: #{tpu_custom_call.1} parent=5 // pred_check
        _
      $region34: #{tpu_custom_call.1} parent=5 // pred_check_branch
        %322 = sbr.rel (%p319) target = $region36
      $region35: #{tpu_custom_call.1} parent=5 // pred_region
        %s323 = ssub.s32 %s27, 1
        %s324 = sand.u32 %s61, 1
        %s325 = scalar_lea.sflag [#allocation3], %s324
        %s326 = sand.u32 %s61, 1
        %s327 = smul.addr %s326, 32
        %s328 = scalar_lea.vmem [#allocation2], %s327
        // Predicated region
        $region37: #{tpu_custom_call.1} parent=35 // pred_check
          %p329 = pneg %p74
        $region38: #{tpu_custom_call.1} parent=35 // pred_check_branch
          %331 = sbr.rel (%p329) target = $region40
        $region39: #{tpu_custom_call.1} parent=35 // pred_region
          %332 = dma.done %s325, 512
        $region40: #{tpu_custom_call.1} parent=35 // pred_fallthru
          _
        %s333 = sand.u32 %s32, 1
        %s334 = scalar_lea.sflag [#allocation6], %s333
        %s335 = sand.u32 %s89, 1
        %s336 = smul.addr %s335, 32
        %s337 = scalar_lea.vmem [#allocation5], %s336
        // Predicated region
        $region41: #{tpu_custom_call.1} parent=35 // pred_check
          %p338 = pneg %p102
        $region42: #{tpu_custom_call.1} parent=35 // pred_check_branch
          %340 = sbr.rel (%p338) target = $region44
        $region43: #{tpu_custom_call.1} parent=35 // pred_region
          %341 = dma.done %s334, 512
        $region44: #{tpu_custom_call.1} parent=35 // pred_fallthru
          _
        %s342 = sand.u32 %s32, 1
        %s343 = scalar_lea.sflag [#allocation6], %s342
        %s344 = sand.u32 %s115, 1
        %s345 = smul.addr %s344, 32
        %s346 = scalar_lea.vmem [#allocation7], %s345
        // Predicated region
        $region45: #{tpu_custom_call.1} parent=35 // pred_check
          %p347 = pneg %p128
        $region46: #{tpu_custom_call.1} parent=35 // pred_check_branch
          %349 = sbr.rel (%p347) target = $region48
        $region47: #{tpu_custom_call.1} parent=35 // pred_region
          %350 = dma.done %s343, 512
        $region48: #{tpu_custom_call.1} parent=35 // pred_fallthru
          _
        %s351 = sand.u32 %s141, 1
        %s352 = scalar_lea.sflag [#allocation9], %s351
        %s353 = sand.u32 %s141, 1
        %s354 = smul.addr %s353, 32
        %s355 = scalar_lea.vmem [#allocation8], %s354
        // Predicated region
        $region49: #{tpu_custom_call.1} parent=35 // pred_check
          %p356 = pneg %p154
        $region50: #{tpu_custom_call.1} parent=35 // pred_check_branch
          %358 = sbr.rel (%p356) target = $region52
        $region51: #{tpu_custom_call.1} parent=35 // pred_region
          %359 = dma.done %s352, 512
        $region52: #{tpu_custom_call.1} parent=35 // pred_fallthru
          _
        %s360 = sand.u32 %s61, 1
        %s361 = scalar_lea.sflag [#allocation3], %s360
        %s362 = sand.u32 %s61, 1
        %s363 = smul.addr %s362, 32
        %s364 = scalar_lea.vmem [#allocation2], %s363
        %p365 = pneg %p74
        %p366 = pneg %p71
        %s367 = sand.u32 %s32, 1
        %s368 = scalar_lea.sflag [#allocation6], %s367
        %s369 = sand.u32 %s89, 1
        %s370 = smul.addr %s369, 32
        %s371 = scalar_lea.vmem [#allocation5], %s370
        %p372 = pneg %p102
        %p373 = pneg %p99
        %s374 = sand.u32 %s32, 1
        %s375 = scalar_lea.sflag [#allocation6], %s374
        %s376 = sand.u32 %s115, 1
        %s377 = smul.addr %s376, 32
        %s378 = scalar_lea.vmem [#allocation7], %s377
        %p379 = pneg %p128
        %p380 = pneg %p125
        %s381 = sand.u32 %s141, 1
        %s382 = scalar_lea.sflag [#allocation9], %s381
        %s383 = sand.u32 %s141, 1
        %s384 = smul.addr %s383, 32
        %s385 = scalar_lea.vmem [#allocation8], %s384
        %p386 = pneg %p154
        %p387 = pneg %p151
        %p388 = pneg %p184
        %p389 = pneg %p181
        %s390 = sand.u32 %s171, 1
        %s391 = scalar_lea.sflag [#allocation4], %s390
        %s392 = sand.u32 %s171, 1
        %s393 = smul.addr %s392, 64
        %s394 = scalar_lea.vmem [#allocation10], %s393
        %p395 = pneg %p214
        %p396 = pneg %p211
        %s397 = sand.u32 %s201, 1
        %s398 = scalar_lea.sflag [#allocation12], %s397
        %s399 = sand.u32 %s201, 1
        %s400 = smul.addr %s399, 64
        %s401 = scalar_lea.vmem [#allocation11], %s400
        %s402 = smul.u32 8, %s38
        %s403 = smul.u32 8, %s38
        %v404 = vld [vmem:[%s328] sm:$0xff]
        %v406 = vcombine.high %v404, %v404
        %v408 = vunpack.c.l.s4 1966171168
        %v409 = vunpack.c.0.s8 %v408
        %v410 = vlaneseq
        %v411 = vshrl.u32 %v410, 7
        %v412 = vsub.s32 %v409, %v411
        %v413 = vrot.slane %v404, %v412
        %v415 = vunpack.c.l.s4 1966171168
        %v416 = vunpack.c.0.s8 %v415
        %v417 = vlaneseq
        %v418 = vshrl.u32 %v417, 7
        %v419 = vsub.s32 %v416, %v418
        %v420 = vrot.slane %v406, %v419
        %v421 = vcombine.high %v413, %v413
        %v422 = vcombine.high %v420, %v420
        %v424 = vunpack.c.l.s4 1966171168
        %v425 = vunpack.c.0.s8 %v424
        %v426 = vlaneseq
        %v427 = vshrl.u32 %v426, 7
        %v428 = vsub.s32 %v425, %v427
        %v429 = vrot.slane %v413, %v428
        %v431 = vunpack.c.l.s4 1966171168
        %v432 = vunpack.c.0.s8 %v431
        %v433 = vlaneseq
        %v434 = vshrl.u32 %v433, 7
        %v435 = vsub.s32 %v432, %v434
        %v436 = vrot.slane %v420, %v435
        %v438 = vunpack.c.l.s4 1966171168
        %v439 = vunpack.c.0.s8 %v438
        %v440 = vlaneseq
        %v441 = vshrl.u32 %v440, 7
        %v442 = vsub.s32 %v439, %v441
        %v443 = vrot.slane %v421, %v442
        %v445 = vunpack.c.l.s4 1966171168
        %v446 = vunpack.c.0.s8 %v445
        %v447 = vlaneseq
        %v448 = vshrl.u32 %v447, 7
        %v449 = vsub.s32 %v446, %v448
        %v450 = vrot.slane %v422, %v449
        %v451 = vcombine.high %v429, %v429
        %v452 = vcombine.high %v436, %v436
        %v453 = vcombine.high %v443, %v443
        %v454 = vcombine.high %v450, %v450
        %v455 = vld [vmem:[%s337] sm:$0xff]
        %v457 = vcombine.high %v455, %v455
        %v459 = vunpack.c.l.s4 1966171168
        %v460 = vunpack.c.0.s8 %v459
        %v461 = vlaneseq
        %v462 = vshrl.u32 %v461, 7
        %v463 = vsub.s32 %v460, %v462
        %v464 = vrot.slane %v455, %v463
        %v466 = vunpack.c.l.s4 1966171168
        %v467 = vunpack.c.0.s8 %v466
        %v468 = vlaneseq
        %v469 = vshrl.u32 %v468, 7
        %v470 = vsub.s32 %v467, %v469
        %v471 = vrot.slane %v457, %v470
        %v472 = vcombine.high %v464, %v464
        %v473 = vcombine.high %v471, %v471
        %v475 = vunpack.c.l.s4 1966171168
        %v476 = vunpack.c.0.s8 %v475
        %v477 = vlaneseq
        %v478 = vshrl.u32 %v477, 7
        %v479 = vsub.s32 %v476, %v478
        %v480 = vrot.slane %v464, %v479
        %v482 = vunpack.c.l.s4 1966171168
        %v483 = vunpack.c.0.s8 %v482
        %v484 = vlaneseq
        %v485 = vshrl.u32 %v484, 7
        %v486 = vsub.s32 %v483, %v485
        %v487 = vrot.slane %v471, %v486
        %v489 = vunpack.c.l.s4 1966171168
        %v490 = vunpack.c.0.s8 %v489
        %v491 = vlaneseq
        %v492 = vshrl.u32 %v491, 7
        %v493 = vsub.s32 %v490, %v492
        %v494 = vrot.slane %v472, %v493
        %v496 = vunpack.c.l.s4 1966171168
        %v497 = vunpack.c.0.s8 %v496
        %v498 = vlaneseq
        %v499 = vshrl.u32 %v498, 7
        %v500 = vsub.s32 %v497, %v499
        %v501 = vrot.slane %v473, %v500
        %v502 = vcombine.high %v480, %v480
        %v503 = vcombine.high %v487, %v487
        %v504 = vcombine.high %v494, %v494
        %v505 = vcombine.high %v501, %v501
        %v506 = vld [vmem:[%s346] sm:$0xff]
        %v507 = vld [vmem:[%s355] sm:$0xff]
        %v508 = vlaneseq
        %v509 = vshrl.u32 %v508, 7
        %v510 = vsub.s32 0, %v509
        %v511 = vrot.slane %v429, %v510
        %v512 = vlaneseq
        %v513 = vshrl.u32 %v512, 7
        %v514 = vsub.s32 0, %v513
        %v515 = vrot.slane %v443, %v514
        %v516 = vlaneseq
        %v517 = vshrl.u32 %v516, 7
        %v518 = vsub.s32 0, %v517
        %v519 = vrot.slane %v451, %v518
        %v520 = vlaneseq
        %v521 = vshrl.u32 %v520, 7
        %v522 = vsub.s32 0, %v521
        %v523 = vrot.slane %v453, %v522
        %v524 = vlaneseq
        %v525 = vshrl.u32 %v524, 7
        %v526 = vsub.s32 0, %v525
        %v527 = vrot.slane %v436, %v526
        %v528 = vlaneseq
        %v529 = vshrl.u32 %v528, 7
        %v530 = vsub.s32 0, %v529
        %v531 = vrot.slane %v450, %v530
        %v532 = vlaneseq
        %v533 = vshrl.u32 %v532, 7
        %v534 = vsub.s32 0, %v533
        %v535 = vrot.slane %v452, %v534
        %v536 = vlaneseq
        %v537 = vshrl.u32 %v536, 7
        %v538 = vsub.s32 0, %v537
        %v539 = vrot.slane %v454, %v538
        %v548 = vmul.f32 %v506, %v511
        %v549 = vmul.f32 %v506, %v515
        %v550 = vmul.f32 %v506, %v519
        %v551 = vmul.f32 %v506, %v523
        %v552 = vmul.f32 %v506, %v527
        %v553 = vmul.f32 %v506, %v531
        %v554 = vmul.f32 %v506, %v535
        %v555 = vmul.f32 %v506, %v539
        %v556 = vlaneseq
        %v557 = vshrl.u32 %v556, 7
        %v558 = vsub.s32 0, %v557
        %v559 = vrot.slane %v480, %v558
        %v560 = vlaneseq
        %v561 = vshrl.u32 %v560, 7
        %v562 = vsub.s32 0, %v561
        %v563 = vrot.slane %v494, %v562
        %v564 = vlaneseq
        %v565 = vshrl.u32 %v564, 7
        %v566 = vsub.s32 0, %v565
        %v567 = vrot.slane %v502, %v566
        %v568 = vlaneseq
        %v569 = vshrl.u32 %v568, 7
        %v570 = vsub.s32 0, %v569
        %v571 = vrot.slane %v504, %v570
        %v572 = vlaneseq
        %v573 = vshrl.u32 %v572, 7
        %v574 = vsub.s32 0, %v573
        %v575 = vrot.slane %v487, %v574
        %v576 = vlaneseq
        %v577 = vshrl.u32 %v576, 7
        %v578 = vsub.s32 0, %v577
        %v579 = vrot.slane %v501, %v578
        %v580 = vlaneseq
        %v581 = vshrl.u32 %v580, 7
        %v582 = vsub.s32 0, %v581
        %v583 = vrot.slane %v503, %v582
        %v584 = vlaneseq
        %v585 = vshrl.u32 %v584, 7
        %v586 = vsub.s32 0, %v585
        %v587 = vrot.slane %v505, %v586
        %v596 = vmul.f32 %v507, %v559
        %v597 = vmul.f32 %v507, %v563
        %v598 = vmul.f32 %v507, %v567
        %v599 = vmul.f32 %v507, %v571
        %v600 = vmul.f32 %v507, %v575
        %v601 = vmul.f32 %v507, %v579
        %v602 = vmul.f32 %v507, %v583
        %v603 = vmul.f32 %v507, %v587
        %v604 = vadd.f32 %v548, %v596
        %v605 = vadd.f32 %v549, %v597
        %v606 = vadd.f32 %v550, %v598
        %v607 = vadd.f32 %v551, %v599
        %v608 = vadd.f32 %v552, %v600
        %v609 = vadd.f32 %v553, %v601
        %v610 = vadd.f32 %v554, %v602
        %v611 = vadd.f32 %v555, %v603
        %v612 = vmul.f32 %v506, %v559
        %v613 = vmul.f32 %v506, %v563
        %v614 = vmul.f32 %v506, %v567
        %v615 = vmul.f32 %v506, %v571
        %v616 = vmul.f32 %v506, %v575
        %v617 = vmul.f32 %v506, %v579
        %v618 = vmul.f32 %v506, %v583
        %v619 = vmul.f32 %v506, %v587
        %v620 = vmul.f32 %v507, %v511
        %v621 = vmul.f32 %v507, %v515
        %v622 = vmul.f32 %v507, %v519
        %v623 = vmul.f32 %v507, %v523
        %v624 = vmul.f32 %v507, %v527
        %v625 = vmul.f32 %v507, %v531
        %v626 = vmul.f32 %v507, %v535
        %v627 = vmul.f32 %v507, %v539
        %v628 = vsub.f32 %v612, %v620
        %v629 = vsub.f32 %v613, %v621
        %v630 = vsub.f32 %v614, %v622
        %v631 = vsub.f32 %v615, %v623
        %v632 = vsub.f32 %v616, %v624
        %v633 = vsub.f32 %v617, %v625
        %v634 = vsub.f32 %v618, %v626
        %v635 = vsub.f32 %v619, %v627
        %636 = vst [vmem:[%s394] sm:$0xff] %v604
        %637 = vst [vmem:[%s394 + $0x8] sm:$0xff] %v605
        %638 = vst [vmem:[%s394 + $0x10] sm:$0xff] %v606
        %639 = vst [vmem:[%s394 + $0x18] sm:$0xff] %v607
        %640 = vst [vmem:[%s394 + $0x20] sm:$0xff] %v608
        %641 = vst [vmem:[%s394 + $0x28] sm:$0xff] %v609
        %642 = vst [vmem:[%s394 + $0x30] sm:$0xff] %v610
        %643 = vst [vmem:[%s394 + $0x38] sm:$0xff] %v611
        %644 = vst [vmem:[%s401] sm:$0xff] %v628
        %645 = vst [vmem:[%s401 + $0x8] sm:$0xff] %v629
        %646 = vst [vmem:[%s401 + $0x10] sm:$0xff] %v630
        %647 = vst [vmem:[%s401 + $0x18] sm:$0xff] %v631
        %648 = vst [vmem:[%s401 + $0x20] sm:$0xff] %v632
        %649 = vst [vmem:[%s401 + $0x28] sm:$0xff] %v633
        %650 = vst [vmem:[%s401 + $0x30] sm:$0xff] %v634
        %651 = vst [vmem:[%s401 + $0x38] sm:$0xff] %v635
        %s652 = scalar_lea.vmem %s328, 8 [#allocation2]
        %v653 = vld [vmem:[%s652] sm:$0xff]
        %v655 = vcombine.high %v653, %v653
        %v657 = vunpack.c.l.s4 1966171168
        %v658 = vunpack.c.0.s8 %v657
        %v659 = vlaneseq
        %v660 = vshrl.u32 %v659, 7
        %v661 = vsub.s32 %v658, %v660
        %v662 = vrot.slane %v653, %v661
        %v664 = vunpack.c.l.s4 1966171168
        %v665 = vunpack.c.0.s8 %v664
        %v666 = vlaneseq
        %v667 = vshrl.u32 %v666, 7
        %v668 = vsub.s32 %v665, %v667
        %v669 = vrot.slane %v655, %v668
        %v670 = vcombine.high %v662, %v662
        %v671 = vcombine.high %v669, %v669
        %v673 = vunpack.c.l.s4 1966171168
        %v674 = vunpack.c.0.s8 %v673
        %v675 = vlaneseq
        %v676 = vshrl.u32 %v675, 7
        %v677 = vsub.s32 %v674, %v676
        %v678 = vrot.slane %v662, %v677
        %v680 = vunpack.c.l.s4 1966171168
        %v681 = vunpack.c.0.s8 %v680
        %v682 = vlaneseq
        %v683 = vshrl.u32 %v682, 7
        %v684 = vsub.s32 %v681, %v683
        %v685 = vrot.slane %v669, %v684
        %v687 = vunpack.c.l.s4 1966171168
        %v688 = vunpack.c.0.s8 %v687
        %v689 = vlaneseq
        %v690 = vshrl.u32 %v689, 7
        %v691 = vsub.s32 %v688, %v690
        %v692 = vrot.slane %v670, %v691
        %v694 = vunpack.c.l.s4 1966171168
        %v695 = vunpack.c.0.s8 %v694
        %v696 = vlaneseq
        %v697 = vshrl.u32 %v696, 7
        %v698 = vsub.s32 %v695, %v697
        %v699 = vrot.slane %v671, %v698
        %v700 = vcombine.high %v678, %v678
        %v701 = vcombine.high %v685, %v685
        %v702 = vcombine.high %v692, %v692
        %v703 = vcombine.high %v699, %v699
        %s704 = scalar_lea.vmem %s337, 8 [#allocation5]
        %v705 = vld [vmem:[%s704] sm:$0xff]
        %v707 = vcombine.high %v705, %v705
        %v709 = vunpack.c.l.s4 1966171168
        %v710 = vunpack.c.0.s8 %v709
        %v711 = vlaneseq
        %v712 = vshrl.u32 %v711, 7
        %v713 = vsub.s32 %v710, %v712
        %v714 = vrot.slane %v705, %v713
        %v716 = vunpack.c.l.s4 1966171168
        %v717 = vunpack.c.0.s8 %v716
        %v718 = vlaneseq
        %v719 = vshrl.u32 %v718, 7
        %v720 = vsub.s32 %v717, %v719
        %v721 = vrot.slane %v707, %v720
        %v722 = vcombine.high %v714, %v714
        %v723 = vcombine.high %v721, %v721
        %v725 = vunpack.c.l.s4 1966171168
        %v726 = vunpack.c.0.s8 %v725
        %v727 = vlaneseq
        %v728 = vshrl.u32 %v727, 7
        %v729 = vsub.s32 %v726, %v728
        %v730 = vrot.slane %v714, %v729
        %v732 = vunpack.c.l.s4 1966171168
        %v733 = vunpack.c.0.s8 %v732
        %v734 = vlaneseq
        %v735 = vshrl.u32 %v734, 7
        %v736 = vsub.s32 %v733, %v735
        %v737 = vrot.slane %v721, %v736
        %v739 = vunpack.c.l.s4 1966171168
        %v740 = vunpack.c.0.s8 %v739
        %v741 = vlaneseq
        %v742 = vshrl.u32 %v741, 7
        %v743 = vsub.s32 %v740, %v742
        %v744 = vrot.slane %v722, %v743
        %v746 = vunpack.c.l.s4 1966171168
        %v747 = vunpack.c.0.s8 %v746
        %v748 = vlaneseq
        %v749 = vshrl.u32 %v748, 7
        %v750 = vsub.s32 %v747, %v749
        %v751 = vrot.slane %v723, %v750
        %v752 = vcombine.high %v730, %v730
        %v753 = vcombine.high %v737, %v737
        %v754 = vcombine.high %v744, %v744
        %v755 = vcombine.high %v751, %v751
        %s756 = scalar_lea.vmem %s346, 8 [#allocation7]
        %v757 = vld [vmem:[%s756] sm:$0xff]
        %s758 = scalar_lea.vmem %s355, 8 [#allocation8]
        %v759 = vld [vmem:[%s758] sm:$0xff]
        %v760 = vlaneseq
        %v761 = vshrl.u32 %v760, 7
        %v762 = vsub.s32 0, %v761
        %v763 = vrot.slane %v678, %v762
        %v764 = vlaneseq
        %v765 = vshrl.u32 %v764, 7
        %v766 = vsub.s32 0, %v765
        %v767 = vrot.slane %v692, %v766
        %v768 = vlaneseq
        %v769 = vshrl.u32 %v768, 7
        %v770 = vsub.s32 0, %v769
        %v771 = vrot.slane %v700, %v770
        %v772 = vlaneseq
        %v773 = vshrl.u32 %v772, 7
        %v774 = vsub.s32 0, %v773
        %v775 = vrot.slane %v702, %v774
        %v776 = vlaneseq
        %v777 = vshrl.u32 %v776, 7
        %v778 = vsub.s32 0, %v777
        %v779 = vrot.slane %v685, %v778
        %v780 = vlaneseq
        %v781 = vshrl.u32 %v780, 7
        %v782 = vsub.s32 0, %v781
        %v783 = vrot.slane %v699, %v782
        %v784 = vlaneseq
        %v785 = vshrl.u32 %v784, 7
        %v786 = vsub.s32 0, %v785
        %v787 = vrot.slane %v701, %v786
        %v788 = vlaneseq
        %v789 = vshrl.u32 %v788, 7
        %v790 = vsub.s32 0, %v789
        %v791 = vrot.slane %v703, %v790
        %v800 = vmul.f32 %v757, %v763
        %v801 = vmul.f32 %v757, %v767
        %v802 = vmul.f32 %v757, %v771
        %v803 = vmul.f32 %v757, %v775
        %v804 = vmul.f32 %v757, %v779
        %v805 = vmul.f32 %v757, %v783
        %v806 = vmul.f32 %v757, %v787
        %v807 = vmul.f32 %v757, %v791
        %v808 = vlaneseq
        %v809 = vshrl.u32 %v808, 7
        %v810 = vsub.s32 0, %v809
        %v811 = vrot.slane %v730, %v810
        %v812 = vlaneseq
        %v813 = vshrl.u32 %v812, 7
        %v814 = vsub.s32 0, %v813
        %v815 = vrot.slane %v744, %v814
        %v816 = vlaneseq
        %v817 = vshrl.u32 %v816, 7
        %v818 = vsub.s32 0, %v817
        %v819 = vrot.slane %v752, %v818
        %v820 = vlaneseq
        %v821 = vshrl.u32 %v820, 7
        %v822 = vsub.s32 0, %v821
        %v823 = vrot.slane %v754, %v822
        %v824 = vlaneseq
        %v825 = vshrl.u32 %v824, 7
        %v826 = vsub.s32 0, %v825
        %v827 = vrot.slane %v737, %v826
        %v828 = vlaneseq
        %v829 = vshrl.u32 %v828, 7
        %v830 = vsub.s32 0, %v829
        %v831 = vrot.slane %v751, %v830
        %v832 = vlaneseq
        %v833 = vshrl.u32 %v832, 7
        %v834 = vsub.s32 0, %v833
        %v835 = vrot.slane %v753, %v834
        %v836 = vlaneseq
        %v837 = vshrl.u32 %v836, 7
        %v838 = vsub.s32 0, %v837
        %v839 = vrot.slane %v755, %v838
        %v848 = vmul.f32 %v759, %v811
        %v849 = vmul.f32 %v759, %v815
        %v850 = vmul.f32 %v759, %v819
        %v851 = vmul.f32 %v759, %v823
        %v852 = vmul.f32 %v759, %v827
        %v853 = vmul.f32 %v759, %v831
        %v854 = vmul.f32 %v759, %v835
        %v855 = vmul.f32 %v759, %v839
        %v856 = vadd.f32 %v800, %v848
        %v857 = vadd.f32 %v801, %v849
        %v858 = vadd.f32 %v802, %v850
        %v859 = vadd.f32 %v803, %v851
        %v860 = vadd.f32 %v804, %v852
        %v861 = vadd.f32 %v805, %v853
        %v862 = vadd.f32 %v806, %v854
        %v863 = vadd.f32 %v807, %v855
        %v864 = vmul.f32 %v757, %v811
        %v865 = vmul.f32 %v757, %v815
        %v866 = vmul.f32 %v757, %v819
        %v867 = vmul.f32 %v757, %v823
        %v868 = vmul.f32 %v757, %v827
        %v869 = vmul.f32 %v757, %v831
        %v870 = vmul.f32 %v757, %v835
        %v871 = vmul.f32 %v757, %v839
        %v872 = vmul.f32 %v759, %v763
        %v873 = vmul.f32 %v759, %v767
        %v874 = vmul.f32 %v759, %v771
        %v875 = vmul.f32 %v759, %v775
        %v876 = vmul.f32 %v759, %v779
        %v877 = vmul.f32 %v759, %v783
        %v878 = vmul.f32 %v759, %v787
        %v879 = vmul.f32 %v759, %v791
        %v880 = vsub.f32 %v864, %v872
        %v881 = vsub.f32 %v865, %v873
        %v882 = vsub.f32 %v866, %v874
        %v883 = vsub.f32 %v867, %v875
        %v884 = vsub.f32 %v868, %v876
        %v885 = vsub.f32 %v869, %v877
        %v886 = vsub.f32 %v870, %v878
        %v887 = vsub.f32 %v871, %v879
        %v888 = vld [vmem:[%s394] sm:$0xff]
        %v889 = vld [vmem:[%s394 + $0x8] sm:$0xff]
        %v890 = vld [vmem:[%s394 + $0x10] sm:$0xff]
        %v891 = vld [vmem:[%s394 + $0x18] sm:$0xff]
        %v892 = vld [vmem:[%s394 + $0x20] sm:$0xff]
        %v893 = vld [vmem:[%s394 + $0x28] sm:$0xff]
        %v894 = vld [vmem:[%s394 + $0x30] sm:$0xff]
        %v895 = vld [vmem:[%s394 + $0x38] sm:$0xff]
        %v896 = vadd.f32 %v888, %v856
        %v897 = vadd.f32 %v889, %v857
        %v898 = vadd.f32 %v890, %v858
        %v899 = vadd.f32 %v891, %v859
        %v900 = vadd.f32 %v892, %v860
        %v901 = vadd.f32 %v893, %v861
        %v902 = vadd.f32 %v894, %v862
        %v903 = vadd.f32 %v895, %v863
        %904 = vst [vmem:[%s394] sm:$0xff] %v896
        %905 = vst [vmem:[%s394 + $0x8] sm:$0xff] %v897
        %906 = vst [vmem:[%s394 + $0x10] sm:$0xff] %v898
        %907 = vst [vmem:[%s394 + $0x18] sm:$0xff] %v899
        %908 = vst [vmem:[%s394 + $0x20] sm:$0xff] %v900
        %909 = vst [vmem:[%s394 + $0x28] sm:$0xff] %v901
        %910 = vst [vmem:[%s394 + $0x30] sm:$0xff] %v902
        %911 = vst [vmem:[%s394 + $0x38] sm:$0xff] %v903
        %v912 = vld [vmem:[%s401] sm:$0xff]
        %v913 = vld [vmem:[%s401 + $0x8] sm:$0xff]
        %v914 = vld [vmem:[%s401 + $0x10] sm:$0xff]
        %v915 = vld [vmem:[%s401 + $0x18] sm:$0xff]
        %v916 = vld [vmem:[%s401 + $0x20] sm:$0xff]
        %v917 = vld [vmem:[%s401 + $0x28] sm:$0xff]
        %v918 = vld [vmem:[%s401 + $0x30] sm:$0xff]
        %v919 = vld [vmem:[%s401 + $0x38] sm:$0xff]
        %v920 = vadd.f32 %v912, %v880
        %v921 = vadd.f32 %v913, %v881
        %v922 = vadd.f32 %v914, %v882
        %v923 = vadd.f32 %v915, %v883
        %v924 = vadd.f32 %v916, %v884
        %v925 = vadd.f32 %v917, %v885
        %v926 = vadd.f32 %v918, %v886
        %v927 = vadd.f32 %v919, %v887
        %928 = vst [vmem:[%s401] sm:$0xff] %v920
        %929 = vst [vmem:[%s401 + $0x8] sm:$0xff] %v921
        %930 = vst [vmem:[%s401 + $0x10] sm:$0xff] %v922
        %931 = vst [vmem:[%s401 + $0x18] sm:$0xff] %v923
        %932 = vst [vmem:[%s401 + $0x20] sm:$0xff] %v924
        %933 = vst [vmem:[%s401 + $0x28] sm:$0xff] %v925
        %934 = vst [vmem:[%s401 + $0x30] sm:$0xff] %v926
        %935 = vst [vmem:[%s401 + $0x38] sm:$0xff] %v927
        %s936 = scalar_lea.vmem %s328, 16 [#allocation2]
        %v937 = vld [vmem:[%s936] sm:$0xff]
        %v939 = vcombine.high %v937, %v937
        %v941 = vunpack.c.l.s4 1966171168
        %v942 = vunpack.c.0.s8 %v941
        %v943 = vlaneseq
        %v944 = vshrl.u32 %v943, 7
        %v945 = vsub.s32 %v942, %v944
        %v946 = vrot.slane %v937, %v945
        %v948 = vunpack.c.l.s4 1966171168
        %v949 = vunpack.c.0.s8 %v948
        %v950 = vlaneseq
        %v951 = vshrl.u32 %v950, 7
        %v952 = vsub.s32 %v949, %v951
        %v953 = vrot.slane %v939, %v952
        %v954 = vcombine.high %v946, %v946
        %v955 = vcombine.high %v953, %v953
        %v957 = vunpack.c.l.s4 1966171168
        %v958 = vunpack.c.0.s8 %v957
        %v959 = vlaneseq
        %v960 = vshrl.u32 %v959, 7
        %v961 = vsub.s32 %v958, %v960
        %v962 = vrot.slane %v946, %v961
        %v964 = vunpack.c.l.s4 1966171168
        %v965 = vunpack.c.0.s8 %v964
        %v966 = vlaneseq
        %v967 = vshrl.u32 %v966, 7
        %v968 = vsub.s32 %v965, %v967
        %v969 = vrot.slane %v953, %v968
        %v971 = vunpack.c.l.s4 1966171168
        %v972 = vunpack.c.0.s8 %v971
        %v973 = vlaneseq
        %v974 = vshrl.u32 %v973, 7
        %v975 = vsub.s32 %v972, %v974
        %v976 = vrot.slane %v954, %v975
        %v978 = vunpack.c.l.s4 1966171168
        %v979 = vunpack.c.0.s8 %v978
        %v980 = vlaneseq
        %v981 = vshrl.u32 %v980, 7
        %v982 = vsub.s32 %v979, %v981
        %v983 = vrot.slane %v955, %v982
        %v984 = vcombine.high %v962, %v962
        %v985 = vcombine.high %v969, %v969
        %v986 = vcombine.high %v976, %v976
        %v987 = vcombine.high %v983, %v983
        %s988 = scalar_lea.vmem %s337, 16 [#allocation5]
        %v989 = vld [vmem:[%s988] sm:$0xff]
        %v991 = vcombine.high %v989, %v989
        %v993 = vunpack.c.l.s4 1966171168
        %v994 = vunpack.c.0.s8 %v993
        %v995 = vlaneseq
        %v996 = vshrl.u32 %v995, 7
        %v997 = vsub.s32 %v994, %v996
        %v998 = vrot.slane %v989, %v997
        %v1000 = vunpack.c.l.s4 1966171168
        %v1001 = vunpack.c.0.s8 %v1000
        %v1002 = vlaneseq
        %v1003 = vshrl.u32 %v1002, 7
        %v1004 = vsub.s32 %v1001, %v1003
        %v1005 = vrot.slane %v991, %v1004
        %v1006 = vcombine.high %v998, %v998
        %v1007 = vcombine.high %v1005, %v1005
        %v1009 = vunpack.c.l.s4 1966171168
        %v1010 = vunpack.c.0.s8 %v1009
        %v1011 = vlaneseq
        %v1012 = vshrl.u32 %v1011, 7
        %v1013 = vsub.s32 %v1010, %v1012
        %v1014 = vrot.slane %v998, %v1013
        %v1016 = vunpack.c.l.s4 1966171168
        %v1017 = vunpack.c.0.s8 %v1016
        %v1018 = vlaneseq
        %v1019 = vshrl.u32 %v1018, 7
        %v1020 = vsub.s32 %v1017, %v1019
        %v1021 = vrot.slane %v1005, %v1020
        %v1023 = vunpack.c.l.s4 1966171168
        %v1024 = vunpack.c.0.s8 %v1023
        %v1025 = vlaneseq
        %v1026 = vshrl.u32 %v1025, 7
        %v1027 = vsub.s32 %v1024, %v1026
        %v1028 = vrot.slane %v1006, %v1027
        %v1030 = vunpack.c.l.s4 1966171168
        %v1031 = vunpack.c.0.s8 %v1030
        %v1032 = vlaneseq
        %v1033 = vshrl.u32 %v1032, 7
        %v1034 = vsub.s32 %v1031, %v1033
        %v1035 = vrot.slane %v1007, %v1034
        %v1036 = vcombine.high %v1014, %v1014
        %v1037 = vcombine.high %v1021, %v1021
        %v1038 = vcombine.high %v1028, %v1028
        %v1039 = vcombine.high %v1035, %v1035
        %s1040 = scalar_lea.vmem %s346, 16 [#allocation7]
        %v1041 = vld [vmem:[%s1040] sm:$0xff]
        %s1042 = scalar_lea.vmem %s355, 16 [#allocation8]
        %v1043 = vld [vmem:[%s1042] sm:$0xff]
        %v1044 = vlaneseq
        %v1045 = vshrl.u32 %v1044, 7
        %v1046 = vsub.s32 0, %v1045
        %v1047 = vrot.slane %v962, %v1046
        %v1048 = vlaneseq
        %v1049 = vshrl.u32 %v1048, 7
        %v1050 = vsub.s32 0, %v1049
        %v1051 = vrot.slane %v976, %v1050
        %v1052 = vlaneseq
        %v1053 = vshrl.u32 %v1052, 7
        %v1054 = vsub.s32 0, %v1053
        %v1055 = vrot.slane %v984, %v1054
        %v1056 = vlaneseq
        %v1057 = vshrl.u32 %v1056, 7
        %v1058 = vsub.s32 0, %v1057
        %v1059 = vrot.slane %v986, %v1058
        %v1060 = vlaneseq
        %v1061 = vshrl.u32 %v1060, 7
        %v1062 = vsub.s32 0, %v1061
        %v1063 = vrot.slane %v969, %v1062
        %v1064 = vlaneseq
        %v1065 = vshrl.u32 %v1064, 7
        %v1066 = vsub.s32 0, %v1065
        %v1067 = vrot.slane %v983, %v1066
        %v1068 = vlaneseq
        %v1069 = vshrl.u32 %v1068, 7
        %v1070 = vsub.s32 0, %v1069
        %v1071 = vrot.slane %v985, %v1070
        %v1072 = vlaneseq
        %v1073 = vshrl.u32 %v1072, 7
        %v1074 = vsub.s32 0, %v1073
        %v1075 = vrot.slane %v987, %v1074
        %v1084 = vmul.f32 %v1041, %v1047
        %v1085 = vmul.f32 %v1041, %v1051
        %v1086 = vmul.f32 %v1041, %v1055
        %v1087 = vmul.f32 %v1041, %v1059
        %v1088 = vmul.f32 %v1041, %v1063
        %v1089 = vmul.f32 %v1041, %v1067
        %v1090 = vmul.f32 %v1041, %v1071
        %v1091 = vmul.f32 %v1041, %v1075
        %v1092 = vlaneseq
        %v1093 = vshrl.u32 %v1092, 7
        %v1094 = vsub.s32 0, %v1093
        %v1095 = vrot.slane %v1014, %v1094
        %v1096 = vlaneseq
        %v1097 = vshrl.u32 %v1096, 7
        %v1098 = vsub.s32 0, %v1097
        %v1099 = vrot.slane %v1028, %v1098
        %v1100 = vlaneseq
        %v1101 = vshrl.u32 %v1100, 7
        %v1102 = vsub.s32 0, %v1101
        %v1103 = vrot.slane %v1036, %v1102
        %v1104 = vlaneseq
        %v1105 = vshrl.u32 %v1104, 7
        %v1106 = vsub.s32 0, %v1105
        %v1107 = vrot.slane %v1038, %v1106
        %v1108 = vlaneseq
        %v1109 = vshrl.u32 %v1108, 7
        %v1110 = vsub.s32 0, %v1109
        %v1111 = vrot.slane %v1021, %v1110
        %v1112 = vlaneseq
        %v1113 = vshrl.u32 %v1112, 7
        %v1114 = vsub.s32 0, %v1113
        %v1115 = vrot.slane %v1035, %v1114
        %v1116 = vlaneseq
        %v1117 = vshrl.u32 %v1116, 7
        %v1118 = vsub.s32 0, %v1117
        %v1119 = vrot.slane %v1037, %v1118
        %v1120 = vlaneseq
        %v1121 = vshrl.u32 %v1120, 7
        %v1122 = vsub.s32 0, %v1121
        %v1123 = vrot.slane %v1039, %v1122
        %v1132 = vmul.f32 %v1043, %v1095
        %v1133 = vmul.f32 %v1043, %v1099
        %v1134 = vmul.f32 %v1043, %v1103
        %v1135 = vmul.f32 %v1043, %v1107
        %v1136 = vmul.f32 %v1043, %v1111
        %v1137 = vmul.f32 %v1043, %v1115
        %v1138 = vmul.f32 %v1043, %v1119
        %v1139 = vmul.f32 %v1043, %v1123
        %v1140 = vadd.f32 %v1084, %v1132
        %v1141 = vadd.f32 %v1085, %v1133
        %v1142 = vadd.f32 %v1086, %v1134
        %v1143 = vadd.f32 %v1087, %v1135
        %v1144 = vadd.f32 %v1088, %v1136
        %v1145 = vadd.f32 %v1089, %v1137
        %v1146 = vadd.f32 %v1090, %v1138
        %v1147 = vadd.f32 %v1091, %v1139
        %v1148 = vmul.f32 %v1041, %v1095
        %v1149 = vmul.f32 %v1041, %v1099
        %v1150 = vmul.f32 %v1041, %v1103
        %v1151 = vmul.f32 %v1041, %v1107
        %v1152 = vmul.f32 %v1041, %v1111
        %v1153 = vmul.f32 %v1041, %v1115
        %v1154 = vmul.f32 %v1041, %v1119
        %v1155 = vmul.f32 %v1041, %v1123
        %v1156 = vmul.f32 %v1043, %v1047
        %v1157 = vmul.f32 %v1043, %v1051
        %v1158 = vmul.f32 %v1043, %v1055
        %v1159 = vmul.f32 %v1043, %v1059
        %v1160 = vmul.f32 %v1043, %v1063
        %v1161 = vmul.f32 %v1043, %v1067
        %v1162 = vmul.f32 %v1043, %v1071
        %v1163 = vmul.f32 %v1043, %v1075
        %v1164 = vsub.f32 %v1148, %v1156
        %v1165 = vsub.f32 %v1149, %v1157
        %v1166 = vsub.f32 %v1150, %v1158
        %v1167 = vsub.f32 %v1151, %v1159
        %v1168 = vsub.f32 %v1152, %v1160
        %v1169 = vsub.f32 %v1153, %v1161
        %v1170 = vsub.f32 %v1154, %v1162
        %v1171 = vsub.f32 %v1155, %v1163
        %v1172 = vld [vmem:[%s394] sm:$0xff]
        %v1173 = vld [vmem:[%s394 + $0x8] sm:$0xff]
        %v1174 = vld [vmem:[%s394 + $0x10] sm:$0xff]
        %v1175 = vld [vmem:[%s394 + $0x18] sm:$0xff]
        %v1176 = vld [vmem:[%s394 + $0x20] sm:$0xff]
        %v1177 = vld [vmem:[%s394 + $0x28] sm:$0xff]
        %v1178 = vld [vmem:[%s394 + $0x30] sm:$0xff]
        %v1179 = vld [vmem:[%s394 + $0x38] sm:$0xff]
        %v1180 = vadd.f32 %v1172, %v1140
        %v1181 = vadd.f32 %v1173, %v1141
        %v1182 = vadd.f32 %v1174, %v1142
        %v1183 = vadd.f32 %v1175, %v1143
        %v1184 = vadd.f32 %v1176, %v1144
        %v1185 = vadd.f32 %v1177, %v1145
        %v1186 = vadd.f32 %v1178, %v1146
        %v1187 = vadd.f32 %v1179, %v1147
        %1188 = vst [vmem:[%s394] sm:$0xff] %v1180
        %1189 = vst [vmem:[%s394 + $0x8] sm:$0xff] %v1181
        %1190 = vst [vmem:[%s394 + $0x10] sm:$0xff] %v1182
        %1191 = vst [vmem:[%s394 + $0x18] sm:$0xff] %v1183
        %1192 = vst [vmem:[%s394 + $0x20] sm:$0xff] %v1184
        %1193 = vst [vmem:[%s394 + $0x28] sm:$0xff] %v1185
        %1194 = vst [vmem:[%s394 + $0x30] sm:$0xff] %v1186
        %1195 = vst [vmem:[%s394 + $0x38] sm:$0xff] %v1187
        %v1196 = vld [vmem:[%s401] sm:$0xff]
        %v1197 = vld [vmem:[%s401 + $0x8] sm:$0xff]
        %v1198 = vld [vmem:[%s401 + $0x10] sm:$0xff]
        %v1199 = vld [vmem:[%s401 + $0x18] sm:$0xff]
        %v1200 = vld [vmem:[%s401 + $0x20] sm:$0xff]
        %v1201 = vld [vmem:[%s401 + $0x28] sm:$0xff]
        %v1202 = vld [vmem:[%s401 + $0x30] sm:$0xff]
        %v1203 = vld [vmem:[%s401 + $0x38] sm:$0xff]
        %v1204 = vadd.f32 %v1196, %v1164
        %v1205 = vadd.f32 %v1197, %v1165
        %v1206 = vadd.f32 %v1198, %v1166
        %v1207 = vadd.f32 %v1199, %v1167
        %v1208 = vadd.f32 %v1200, %v1168
        %v1209 = vadd.f32 %v1201, %v1169
        %v1210 = vadd.f32 %v1202, %v1170
        %v1211 = vadd.f32 %v1203, %v1171
        %1212 = vst [vmem:[%s401] sm:$0xff] %v1204
        %1213 = vst [vmem:[%s401 + $0x8] sm:$0xff] %v1205
        %1214 = vst [vmem:[%s401 + $0x10] sm:$0xff] %v1206
        %1215 = vst [vmem:[%s401 + $0x18] sm:$0xff] %v1207
        %1216 = vst [vmem:[%s401 + $0x20] sm:$0xff] %v1208
        %1217 = vst [vmem:[%s401 + $0x28] sm:$0xff] %v1209
        %1218 = vst [vmem:[%s401 + $0x30] sm:$0xff] %v1210
        %1219 = vst [vmem:[%s401 + $0x38] sm:$0xff] %v1211
        %s1220 = scalar_lea.vmem %s328, 24 [#allocation2]
        %v1221 = vld [vmem:[%s1220] sm:$0xff]
        %v1223 = vcombine.high %v1221, %v1221
        %v1225 = vunpack.c.l.s4 1966171168
        %v1226 = vunpack.c.0.s8 %v1225
        %v1227 = vlaneseq
        %v1228 = vshrl.u32 %v1227, 7
        %v1229 = vsub.s32 %v1226, %v1228
        %v1230 = vrot.slane %v1221, %v1229
        %v1232 = vunpack.c.l.s4 1966171168
        %v1233 = vunpack.c.0.s8 %v1232
        %v1234 = vlaneseq
        %v1235 = vshrl.u32 %v1234, 7
        %v1236 = vsub.s32 %v1233, %v1235
        %v1237 = vrot.slane %v1223, %v1236
        %v1238 = vcombine.high %v1230, %v1230
        %v1239 = vcombine.high %v1237, %v1237
        %v1241 = vunpack.c.l.s4 1966171168
        %v1242 = vunpack.c.0.s8 %v1241
        %v1243 = vlaneseq
        %v1244 = vshrl.u32 %v1243, 7
        %v1245 = vsub.s32 %v1242, %v1244
        %v1246 = vrot.slane %v1230, %v1245
        %v1248 = vunpack.c.l.s4 1966171168
        %v1249 = vunpack.c.0.s8 %v1248
        %v1250 = vlaneseq
        %v1251 = vshrl.u32 %v1250, 7
        %v1252 = vsub.s32 %v1249, %v1251
        %v1253 = vrot.slane %v1237, %v1252
        %v1255 = vunpack.c.l.s4 1966171168
        %v1256 = vunpack.c.0.s8 %v1255
        %v1257 = vlaneseq
        %v1258 = vshrl.u32 %v1257, 7
        %v1259 = vsub.s32 %v1256, %v1258
        %v1260 = vrot.slane %v1238, %v1259
        %v1262 = vunpack.c.l.s4 1966171168
        %v1263 = vunpack.c.0.s8 %v1262
        %v1264 = vlaneseq
        %v1265 = vshrl.u32 %v1264, 7
        %v1266 = vsub.s32 %v1263, %v1265
        %v1267 = vrot.slane %v1239, %v1266
        %v1268 = vcombine.high %v1246, %v1246
        %v1269 = vcombine.high %v1253, %v1253
        %v1270 = vcombine.high %v1260, %v1260
        %v1271 = vcombine.high %v1267, %v1267
        %s1272 = scalar_lea.vmem %s337, 24 [#allocation5]
        %v1273 = vld [vmem:[%s1272] sm:$0xff]
        %v1275 = vcombine.high %v1273, %v1273
        %v1277 = vunpack.c.l.s4 1966171168
        %v1278 = vunpack.c.0.s8 %v1277
        %v1279 = vlaneseq
        %v1280 = vshrl.u32 %v1279, 7
        %v1281 = vsub.s32 %v1278, %v1280
        %v1282 = vrot.slane %v1273, %v1281
        %v1284 = vunpack.c.l.s4 1966171168
        %v1285 = vunpack.c.0.s8 %v1284
        %v1286 = vlaneseq
        %v1287 = vshrl.u32 %v1286, 7
        %v1288 = vsub.s32 %v1285, %v1287
        %v1289 = vrot.slane %v1275, %v1288
        %v1290 = vcombine.high %v1282, %v1282
        %v1291 = vcombine.high %v1289, %v1289
        %v1293 = vunpack.c.l.s4 1966171168
        %v1294 = vunpack.c.0.s8 %v1293
        %v1295 = vlaneseq
        %v1296 = vshrl.u32 %v1295, 7
        %v1297 = vsub.s32 %v1294, %v1296
        %v1298 = vrot.slane %v1282, %v1297
        %v1300 = vunpack.c.l.s4 1966171168
        %v1301 = vunpack.c.0.s8 %v1300
        %v1302 = vlaneseq
        %v1303 = vshrl.u32 %v1302, 7
        %v1304 = vsub.s32 %v1301, %v1303
        %v1305 = vrot.slane %v1289, %v1304
        %v1307 = vunpack.c.l.s4 1966171168
        %v1308 = vunpack.c.0.s8 %v1307
        %v1309 = vlaneseq
        %v1310 = vshrl.u32 %v1309, 7
        %v1311 = vsub.s32 %v1308, %v1310
        %v1312 = vrot.slane %v1290, %v1311
        %v1314 = vunpack.c.l.s4 1966171168
        %v1315 = vunpack.c.0.s8 %v1314
        %v1316 = vlaneseq
        %v1317 = vshrl.u32 %v1316, 7
        %v1318 = vsub.s32 %v1315, %v1317
        %v1319 = vrot.slane %v1291, %v1318
        %v1320 = vcombine.high %v1298, %v1298
        %v1321 = vcombine.high %v1305, %v1305
        %v1322 = vcombine.high %v1312, %v1312
        %v1323 = vcombine.high %v1319, %v1319
        %s1324 = scalar_lea.vmem %s346, 24 [#allocation7]
        %v1325 = vld [vmem:[%s1324] sm:$0xff]
        %s1326 = scalar_lea.vmem %s355, 24 [#allocation8]
        %v1327 = vld [vmem:[%s1326] sm:$0xff]
        %v1328 = vlaneseq
        %v1329 = vshrl.u32 %v1328, 7
        %v1330 = vsub.s32 0, %v1329
        %v1331 = vrot.slane %v1246, %v1330
        %v1332 = vlaneseq
        %v1333 = vshrl.u32 %v1332, 7
        %v1334 = vsub.s32 0, %v1333
        %v1335 = vrot.slane %v1260, %v1334
        %v1336 = vlaneseq
        %v1337 = vshrl.u32 %v1336, 7
        %v1338 = vsub.s32 0, %v1337
        %v1339 = vrot.slane %v1268, %v1338
        %v1340 = vlaneseq
        %v1341 = vshrl.u32 %v1340, 7
        %v1342 = vsub.s32 0, %v1341
        %v1343 = vrot.slane %v1270, %v1342
        %v1344 = vlaneseq
        %v1345 = vshrl.u32 %v1344, 7
        %v1346 = vsub.s32 0, %v1345
        %v1347 = vrot.slane %v1253, %v1346
        %v1348 = vlaneseq
        %v1349 = vshrl.u32 %v1348, 7
        %v1350 = vsub.s32 0, %v1349
        %v1351 = vrot.slane %v1267, %v1350
        %v1352 = vlaneseq
        %v1353 = vshrl.u32 %v1352, 7
        %v1354 = vsub.s32 0, %v1353
        %v1355 = vrot.slane %v1269, %v1354
        %v1356 = vlaneseq
        %v1357 = vshrl.u32 %v1356, 7
        %v1358 = vsub.s32 0, %v1357
        %v1359 = vrot.slane %v1271, %v1358
        %v1368 = vmul.f32 %v1325, %v1331
        %v1369 = vmul.f32 %v1325, %v1335
        %v1370 = vmul.f32 %v1325, %v1339
        %v1371 = vmul.f32 %v1325, %v1343
        %v1372 = vmul.f32 %v1325, %v1347
        %v1373 = vmul.f32 %v1325, %v1351
        %v1374 = vmul.f32 %v1325, %v1355
        %v1375 = vmul.f32 %v1325, %v1359
        %v1376 = vlaneseq
        %v1377 = vshrl.u32 %v1376, 7
        %v1378 = vsub.s32 0, %v1377
        %v1379 = vrot.slane %v1298, %v1378
        %v1380 = vlaneseq
        %v1381 = vshrl.u32 %v1380, 7
        %v1382 = vsub.s32 0, %v1381
        %v1383 = vrot.slane %v1312, %v1382
        %v1384 = vlaneseq
        %v1385 = vshrl.u32 %v1384, 7
        %v1386 = vsub.s32 0, %v1385
        %v1387 = vrot.slane %v1320, %v1386
        %v1388 = vlaneseq
        %v1389 = vshrl.u32 %v1388, 7
        %v1390 = vsub.s32 0, %v1389
        %v1391 = vrot.slane %v1322, %v1390
        %v1392 = vlaneseq
        %v1393 = vshrl.u32 %v1392, 7
        %v1394 = vsub.s32 0, %v1393
        %v1395 = vrot.slane %v1305, %v1394
        %v1396 = vlaneseq
        %v1397 = vshrl.u32 %v1396, 7
        %v1398 = vsub.s32 0, %v1397
        %v1399 = vrot.slane %v1319, %v1398
        %v1400 = vlaneseq
        %v1401 = vshrl.u32 %v1400, 7
        %v1402 = vsub.s32 0, %v1401
        %v1403 = vrot.slane %v1321, %v1402
        %v1404 = vlaneseq
        %v1405 = vshrl.u32 %v1404, 7
        %v1406 = vsub.s32 0, %v1405
        %v1407 = vrot.slane %v1323, %v1406
        %v1416 = vmul.f32 %v1327, %v1379
        %v1417 = vmul.f32 %v1327, %v1383
        %v1418 = vmul.f32 %v1327, %v1387
        %v1419 = vmul.f32 %v1327, %v1391
        %v1420 = vmul.f32 %v1327, %v1395
        %v1421 = vmul.f32 %v1327, %v1399
        %v1422 = vmul.f32 %v1327, %v1403
        %v1423 = vmul.f32 %v1327, %v1407
        %v1424 = vadd.f32 %v1368, %v1416
        %v1425 = vadd.f32 %v1369, %v1417
        %v1426 = vadd.f32 %v1370, %v1418
        %v1427 = vadd.f32 %v1371, %v1419
        %v1428 = vadd.f32 %v1372, %v1420
        %v1429 = vadd.f32 %v1373, %v1421
        %v1430 = vadd.f32 %v1374, %v1422
        %v1431 = vadd.f32 %v1375, %v1423
        %v1432 = vmul.f32 %v1325, %v1379
        %v1433 = vmul.f32 %v1325, %v1383
        %v1434 = vmul.f32 %v1325, %v1387
        %v1435 = vmul.f32 %v1325, %v1391
        %v1436 = vmul.f32 %v1325, %v1395
        %v1437 = vmul.f32 %v1325, %v1399
        %v1438 = vmul.f32 %v1325, %v1403
        %v1439 = vmul.f32 %v1325, %v1407
        %v1440 = vmul.f32 %v1327, %v1331
        %v1441 = vmul.f32 %v1327, %v1335
        %v1442 = vmul.f32 %v1327, %v1339
        %v1443 = vmul.f32 %v1327, %v1343
        %v1444 = vmul.f32 %v1327, %v1347
        %v1445 = vmul.f32 %v1327, %v1351
        %v1446 = vmul.f32 %v1327, %v1355
        %v1447 = vmul.f32 %v1327, %v1359
        %v1448 = vsub.f32 %v1432, %v1440
        %v1449 = vsub.f32 %v1433, %v1441
        %v1450 = vsub.f32 %v1434, %v1442
        %v1451 = vsub.f32 %v1435, %v1443
        %v1452 = vsub.f32 %v1436, %v1444
        %v1453 = vsub.f32 %v1437, %v1445
        %v1454 = vsub.f32 %v1438, %v1446
        %v1455 = vsub.f32 %v1439, %v1447
        %v1456 = vld [vmem:[%s394] sm:$0xff]
        %v1457 = vld [vmem:[%s394 + $0x8] sm:$0xff]
        %v1458 = vld [vmem:[%s394 + $0x10] sm:$0xff]
        %v1459 = vld [vmem:[%s394 + $0x18] sm:$0xff]
        %v1460 = vld [vmem:[%s394 + $0x20] sm:$0xff]
        %v1461 = vld [vmem:[%s394 + $0x28] sm:$0xff]
        %v1462 = vld [vmem:[%s394 + $0x30] sm:$0xff]
        %v1463 = vld [vmem:[%s394 + $0x38] sm:$0xff]
        %v1464 = vadd.f32 %v1456, %v1424
        %v1465 = vadd.f32 %v1457, %v1425
        %v1466 = vadd.f32 %v1458, %v1426
        %v1467 = vadd.f32 %v1459, %v1427
        %v1468 = vadd.f32 %v1460, %v1428
        %v1469 = vadd.f32 %v1461, %v1429
        %v1470 = vadd.f32 %v1462, %v1430
        %v1471 = vadd.f32 %v1463, %v1431
        %1472 = vst [vmem:[%s394] sm:$0xff] %v1464
        %1473 = vst [vmem:[%s394 + $0x8] sm:$0xff] %v1465
        %1474 = vst [vmem:[%s394 + $0x10] sm:$0xff] %v1466
        %1475 = vst [vmem:[%s394 + $0x18] sm:$0xff] %v1467
        %1476 = vst [vmem:[%s394 + $0x20] sm:$0xff] %v1468
        %1477 = vst [vmem:[%s394 + $0x28] sm:$0xff] %v1469
        %1478 = vst [vmem:[%s394 + $0x30] sm:$0xff] %v1470
        %1479 = vst [vmem:[%s394 + $0x38] sm:$0xff] %v1471
        %v1480 = vld [vmem:[%s401] sm:$0xff]
        %v1481 = vld [vmem:[%s401 + $0x8] sm:$0xff]
        %v1482 = vld [vmem:[%s401 + $0x10] sm:$0xff]
        %v1483 = vld [vmem:[%s401 + $0x18] sm:$0xff]
        %v1484 = vld [vmem:[%s401 + $0x20] sm:$0xff]
        %v1485 = vld [vmem:[%s401 + $0x28] sm:$0xff]
        %v1486 = vld [vmem:[%s401 + $0x30] sm:$0xff]
        %v1487 = vld [vmem:[%s401 + $0x38] sm:$0xff]
        %v1488 = vadd.f32 %v1480, %v1448
        %v1489 = vadd.f32 %v1481, %v1449
        %v1490 = vadd.f32 %v1482, %v1450
        %v1491 = vadd.f32 %v1483, %v1451
        %v1492 = vadd.f32 %v1484, %v1452
        %v1493 = vadd.f32 %v1485, %v1453
        %v1494 = vadd.f32 %v1486, %v1454
        %v1495 = vadd.f32 %v1487, %v1455
        %1496 = vst [vmem:[%s401] sm:$0xff] %v1488
        %1497 = vst [vmem:[%s401 + $0x8] sm:$0xff] %v1489
        %1498 = vst [vmem:[%s401 + $0x10] sm:$0xff] %v1490
        %1499 = vst [vmem:[%s401 + $0x18] sm:$0xff] %v1491
        %1500 = vst [vmem:[%s401 + $0x20] sm:$0xff] %v1492
        %1501 = vst [vmem:[%s401 + $0x28] sm:$0xff] %v1493
        %1502 = vst [vmem:[%s401 + $0x30] sm:$0xff] %v1494
        %1503 = vst [vmem:[%s401 + $0x38] sm:$0xff] %v1495
        %s1504 = sand.u32 %s171, 1
        %s1505 = scalar_lea.sflag [#allocation4], %s1504
        %s1506 = sand.u32 %s171, 1
        %s1507 = smul.addr %s1506, 64
        %s1508 = scalar_lea.vmem [#allocation10], %s1507
        %s1509 = sand.u32 %s201, 1
        %s1510 = scalar_lea.sflag [#allocation12], %s1509
        %s1511 = sand.u32 %s201, 1
        %s1512 = smul.addr %s1511, 64
        %s1513 = scalar_lea.vmem [#allocation11], %s1512
        // Predicated region
        $region53: #{tpu_custom_call.1} parent=35 // pred_check
          %p1514 = pneg %p181
        $region54: #{tpu_custom_call.1} parent=35 // pred_check_branch
          %1516 = sbr.rel (%p1514) target = $region56
        $region55: #{tpu_custom_call.1} parent=35 // pred_region
          %s1517 = smul.u32 8, %s38
          %s1519 = ssub.s32 1024, 1024
          %1520 = vsyncadd %s1505, %s1519
          %s1521 = smul.addr %s1517, 2
          %s1522 = sadd.s32 %s39, %s1521
          %s1523 = smul.addr %s37, 32
          %s1524 = sadd.s32 %s1522, %s1523
          %s1525 = smul.addr %s1524, 128
          %s1526 = scalar_lea.hbm %s4, %s1525
          %s1527 = sshll.u32 %s1508, 4
          %s1528 = int_to_ptr.vmem [resolvable:$true] %s1527
          %1533 = dma.vmem_to_hbm [thread:$0]  %s1528, 1024, %s1526, %s1505, 128, 256, 8
        $region56: #{tpu_custom_call.1} parent=35 // pred_fallthru
          _
        // Predicated region
        $region57: #{tpu_custom_call.1} parent=35 // pred_check
          %p1534 = pneg %p211
        $region58: #{tpu_custom_call.1} parent=35 // pred_check_branch
          %1536 = sbr.rel (%p1534) target = $region60
        $region59: #{tpu_custom_call.1} parent=35 // pred_region
          %s1537 = smul.u32 8, %s38
          %s1539 = ssub.s32 1024, 1024
          %1540 = vsyncadd %s1510, %s1539
          %s1541 = smul.addr %s1537, 2
          %s1542 = sadd.s32 %s39, %s1541
          %s1543 = smul.addr %s37, 32
          %s1544 = sadd.s32 %s1542, %s1543
          %s1545 = smul.addr %s1544, 128
          %s1546 = scalar_lea.hbm %s5, %s1545
          %s1547 = sshll.u32 %s1513, 4
          %s1548 = int_to_ptr.vmem [resolvable:$true] %s1547
          %1553 = dma.vmem_to_hbm [thread:$0]  %s1548, 1024, %s1546, %s1510, 128, 256, 8
        $region60: #{tpu_custom_call.1} parent=35 // pred_fallthru
          _
      $region36: #{tpu_custom_call.1} parent=5 // pred_fallthru
        _
      %p1554 = scmp.le.s32.totalorder 2, %s27
      // Predicated region
      $region61: #{tpu_custom_call.1} parent=5 // pred_check
        %p1555 = pneg %p1554
      $region62: #{tpu_custom_call.1} parent=5 // pred_check_branch
        %1557 = sbr.rel (%p1555) target = $region64
      $region63: #{tpu_custom_call.1} parent=5 // pred_region
        %s1558 = ssub.s32 %s27, 2
        // Predicated region
        $region65: #{tpu_custom_call.1} parent=63 // pred_check
          %p1559 = pneg %p187
        $region66: #{tpu_custom_call.1} parent=63 // pred_check_branch
          %1561 = sbr.rel (%p1559) target = $region68
        $region67: #{tpu_custom_call.1} parent=63 // pred_region
          %s1562 = sand.u32 %s172, 1
          %s1563 = scalar_lea.sflag [#allocation4], %s1562
          %s1564 = sand.u32 %s172, 1
          %s1565 = smul.addr %s1564, 64
          %s1566 = scalar_lea.vmem [#allocation10], %s1565
          %1567 = dma.done %s1563, 1024
        $region68: #{tpu_custom_call.1} parent=63 // pred_fallthru
          _
        // Predicated region
        $region69: #{tpu_custom_call.1} parent=63 // pred_check
          %p1568 = pneg %p217
        $region70: #{tpu_custom_call.1} parent=63 // pred_check_branch
          %1570 = sbr.rel (%p1568) target = $region72
        $region71: #{tpu_custom_call.1} parent=63 // pred_region
          %s1571 = sand.u32 %s202, 1
          %s1572 = scalar_lea.sflag [#allocation12], %s1571
          %s1573 = sand.u32 %s202, 1
          %s1574 = smul.addr %s1573, 64
          %s1575 = scalar_lea.vmem [#allocation11], %s1574
          %1576 = dma.done %s1572, 1024
        $region72: #{tpu_custom_call.1} parent=63 // pred_fallthru
          _
      $region64: #{tpu_custom_call.1} parent=5 // pred_fallthru
        _
    $region6: #{tpu_custom_call.1} parent=1 // loop_footer
      %s31 = sadd.s32 1, %s27
    $region7: #{tpu_custom_call.1} parent=1 // loop_footer_branch
      %26 = sbr.rel target = $region3
    $region8: #{tpu_custom_call.1} parent=1 // loop_exit
      _
    %1577 = vsyncpa [#allocation3], 1
    %s1578 = scalar_lea.sflag [#allocation3], 1
    %1579 = vsyncpa %s1578, 1
    %1580 = vsyncpa [#allocation6], 1
    %s1581 = scalar_lea.sflag [#allocation6], 1
    %1582 = vsyncpa %s1581, 1
    %1583 = vsyncpa [#allocation9], 1
    %s1584 = scalar_lea.sflag [#allocation9], 1
    %1585 = vsyncpa %s1584, 1
    %1586 = vsyncpa [#allocation4], 1
    %s1587 = scalar_lea.sflag [#allocation4], 1
    %1588 = vsyncpa %s1587, 1
    %1589 = vsyncpa [#allocation12], 1
    %s1590 = scalar_lea.sflag [#allocation12], 1
    %1591 = vsyncpa %s1590, 1

</llo_original>
